<compile_context>
chip_gen: v6e
topology: v6e:2x2x1
jax: 0.10.0
libtpu: 0.0.40
codegen_flags: <defaults>
</compile_context>

<pallas_src>
import functools
import math

import jax
import jax.numpy as jnp
from jax import lax
from jax.experimental import pallas as pl
from jax.experimental.pallas import tpu as pltpu

_VMEM_LIMIT = 48 * 1024 * 1024   # < v7x 64 MiB/TC; > default scoped limit on v5e/v6e


def _row_tile(m):
    """Fixed large row tile; pl.cdiv grid handles any ragged tail."""
    return m if m <= 512 else 512


# ----------------------------------------------------------------------------
# Kernel 1a: layer-0 input projection -> per-direction gate pre-activations.
#   out[d] = x @ w[d] + b[d]   (bf16 in, f32 accumulate, bf16 out)
# ----------------------------------------------------------------------------
def _proj_single_kernel(x_ref, w_ref, b_ref, out_ref):
    acc = jnp.dot(x_ref[...], w_ref[...], preferred_element_type=jnp.float32)
    out_ref[...] = (acc + b_ref[...]).astype(out_ref.dtype)


def proj_single(x2d, w_stack, b_stack):
    """x2d: (M, C) bf16; w_stack: (2, C, G) bf16; b_stack: (2, 1, G) f32
    -> (2, M, G) bf16."""
    M, C = x2d.shape
    G = w_stack.shape[-1]
    tm = _row_tile(M)
    return pl.pallas_call(
        _proj_single_kernel,
        out_shape=jax.ShapeDtypeStruct((2, M, G), jnp.bfloat16),
        grid=(pl.cdiv(M, tm), 2),
        in_specs=[
            pl.BlockSpec((tm, C), lambda i, d: (i, 0)),
            pl.BlockSpec((None, C, G), lambda i, d: (d, 0, 0)),
            pl.BlockSpec((None, 1, G), lambda i, d: (d, 0, 0)),
        ],
        out_specs=pl.BlockSpec((None, tm, G), lambda i, d: (d, i, 0)),
        compiler_params=pltpu.CompilerParams(
            dimension_semantics=("parallel", "arbitrary"),
            vmem_limit_bytes=_VMEM_LIMIT),
    )(x2d, w_stack, b_stack)


# ----------------------------------------------------------------------------
# Kernel 1b: projection for layers >= 1.  The previous layer's output stays as
# two stacked direction halves; the weight is pre-split so no concat is needed:
#   out[d] = x[0] @ w[d,0] + x[1] @ w[d,1] + b[d]
# ----------------------------------------------------------------------------
def _proj_pair_kernel(x_ref, w_ref, b_ref, out_ref):
    acc = jnp.dot(x_ref[0], w_ref[0], preferred_element_type=jnp.float32)
    acc = acc + jnp.dot(x_ref[1], w_ref[1], preferred_element_type=jnp.float32)
    out_ref[...] = (acc + b_ref[...]).astype(out_ref.dtype)


def proj_pair(x_stack, w_stack, b_stack):
    """x_stack: (2, M, H) bf16; w_stack: (2, 2, H, G) bf16; b_stack: (2, 1, G) f32
    -> (2, M, G) bf16."""
    _, M, H = x_stack.shape
    G = w_stack.shape[-1]
    tm = _row_tile(M)
    return pl.pallas_call(
        _proj_pair_kernel,
        out_shape=jax.ShapeDtypeStruct((2, M, G), jnp.bfloat16),
        grid=(pl.cdiv(M, tm), 2),
        in_specs=[
            pl.BlockSpec((2, tm, H), lambda i, d: (0, i, 0)),
            pl.BlockSpec((None, 2, H, G), lambda i, d: (d, 0, 0, 0)),
            pl.BlockSpec((None, 1, G), lambda i, d: (d, 0, 0)),
        ],
        out_specs=pl.BlockSpec((None, tm, G), lambda i, d: (d, i, 0)),
        compiler_params=pltpu.CompilerParams(
            dimension_semantics=("parallel", "arbitrary"),
            vmem_limit_bytes=_VMEM_LIMIT),
    )(x_stack, w_stack, b_stack)


# ----------------------------------------------------------------------------
# Kernel 2: LSTM recurrence.  One direction per grid program (grid=(2,)),
# vreg-carried h/c state, in-kernel time reversal, lane-dense output stores.
# ----------------------------------------------------------------------------
def _bilstm_recur_kernel(xp_ref, whh_ref, out_ref):
    """xp_ref:  (K, B, 4H) bf16 precomputed x@W_ih + b for this direction.
    whh_ref: (H, 4H) bf16 recurrent weights.
    out_ref: (K, B, H) bf16 hidden states in natural time order."""
    K, B, _ = xp_ref.shape
    H = whh_ref.shape[0]
    cdt = whh_ref.dtype
    rev = pl.program_id(0) == 1      # backward direction walks time reversed

    def step(t, carry):
        h, c = carry
        tt = jnp.where(rev, K - 1 - t, t)
        pre = xp_ref[tt].astype(jnp.float32) + jnp.dot(
            h.astype(cdt), whh_ref[...], preferred_element_type=jnp.float32)
        # PyTorch gate order i, f, g, o; i/f sigmoid over one contiguous slice.
        # TODO(synk): pad each gate block to a 128-lane boundary for production H.
        sig_if = jax.nn.sigmoid(pre[:, 0:2 * H])
        g = jnp.tanh(pre[:, 2 * H:3 * H])
        o = jax.nn.sigmoid(pre[:, 3 * H:4 * H])
        c_new = sig_if[:, H:2 * H] * c + sig_if[:, 0:H] * g
        h_new = o * jnp.tanh(c_new)
        out_ref[tt] = h_new.astype(out_ref.dtype)   # full-width, lane-dense store
        return h_new, c_new

    h0 = jnp.zeros((B, H), jnp.float32)
    c0 = jnp.zeros((B, H), jnp.float32)
    lax.fori_loop(0, K, step, (h0, c0), unroll=True if K <= 16 else 4)


def bilstm_recurrence(xp, whh_stack):
    """xp: (2, K, B, 4H) bf16; whh_stack: (2, H, 4H) bf16 -> (2, K, B, H) bf16."""
    _, K, B, G = xp.shape
    H = whh_stack.shape[1]
    # TODO(synk): K-chunked manual double-buffering for production sequence lengths.
    return pl.pallas_call(
        _bilstm_recur_kernel,
        out_shape=jax.ShapeDtypeStruct((2, K, B, H), jnp.bfloat16),
        grid=(2,),
        in_specs=[
            pl.BlockSpec((None, K, B, G), lambda d: (d, 0, 0, 0)),
            pl.BlockSpec((None, H, G), lambda d: (d, 0, 0)),
        ],
        out_specs=pl.BlockSpec((None, K, B, H), lambda d: (d, 0, 0, 0)),
        compiler_params=pltpu.CompilerParams(
            dimension_semantics=("parallel",),     # v7x: one direction per TensorCore
            vmem_limit_bytes=_VMEM_LIMIT),
    )(xp, whh_stack)


# ----------------------------------------------------------------------------
# Kernel 3: head Linear (two stacked halves) + per-source softmax.
# ----------------------------------------------------------------------------
def _head_softmax_kernel(x_ref, w_ref, b_ref, out_ref, *, n_sources, n_feat):
    logits = jnp.dot(x_ref[0], w_ref[0], preferred_element_type=jnp.float32)
    logits = logits + jnp.dot(x_ref[1], w_ref[1], preferred_element_type=jnp.float32)
    logits = logits + b_ref[...]
    for s in range(n_sources):
        chunk = logits[:, s * n_feat:(s + 1) * n_feat]
        m = jnp.max(chunk, axis=-1, keepdims=True)
        e = jnp.exp(chunk - m)
        # Exact normalization (approx reciprocal breaks sum-to-1 at ~bf16 eps).
        p = e / jnp.sum(e, axis=-1, keepdims=True)
        out_ref[:, s * n_feat:(s + 1) * n_feat] = p.astype(out_ref.dtype)


def head_softmax(x_stack, w_stack, b, n_sources, n_feat):
    """x_stack: (2, M, H) bf16; w_stack: (2, H, S*N) bf16; b: (1, S*N) f32
    -> (M, S*N) f32 per-source softmax probabilities."""
    _, M, H = x_stack.shape
    SN = w_stack.shape[-1]
    tm = _row_tile(M)
    kernel = functools.partial(_head_softmax_kernel,
                               n_sources=n_sources, n_feat=n_feat)
    return pl.pallas_call(
        kernel,
        out_shape=jax.ShapeDtypeStruct((M, SN), jnp.float32),
        grid=(pl.cdiv(M, tm),),
        in_specs=[
            pl.BlockSpec((2, tm, H), lambda i: (0, i, 0)),
            pl.BlockSpec((2, H, SN), lambda i: (0, 0, 0)),
            pl.BlockSpec((1, SN), lambda i: (0, 0)),
        ],
        out_specs=pl.BlockSpec((tm, SN), lambda i: (i, 0)),
        compiler_params=pltpu.CompilerParams(
            dimension_semantics=("parallel",),
            vmem_limit_bytes=_VMEM_LIMIT),
    )(x_stack, w_stack, b)


# ----------------------------------------------------------------------------
# Parameter construction (mirrors the PyTorch __init__) and one-time packing.
# ----------------------------------------------------------------------------
def xavier_normal(key, shape):
    fan_out, fan_in = shape
    std = math.sqrt(2.0 / (fan_in + fan_out))
    return std * jax.random.normal(key, shape, dtype=jnp.float32)


def init_separator_params(key, input_size, hidden_size, num_layers, n_sources):
    rnn_output_size = 2 * hidden_size
    params = {"rnn": []}
    for li in range(num_layers):
        in_sz = input_size if li == 0 else rnn_output_size
        layer = {}
        for d in ("fwd", "bwd"):
            key, k1, k2 = jax.random.split(key, 3)
            layer[d] = dict(
                w_ih=xavier_normal(k1, (4 * hidden_size, in_sz)),
                w_hh=xavier_normal(k2, (4 * hidden_size, hidden_size)),
                b_ih=jnp.zeros((4 * hidden_size,), jnp.float32),   # module zero-inits biases
                b_hh=jnp.zeros((4 * hidden_size,), jnp.float32),
            )
        params["rnn"].append(layer)
    key, kw, kb = jax.random.split(key, 3)
    bound = 1.0 / math.sqrt(rnn_output_size)
    params["head_w"] = jax.random.uniform(
        kw, (n_sources * input_size, rnn_output_size),
        minval=-bound, maxval=bound, dtype=jnp.float32)
    params["head_b"] = jax.random.uniform(
        kb, (n_sources * input_size,), minval=-bound, maxval=bound,
        dtype=jnp.float32)
    return params


def pack_separator_params(params, hidden_size):
    """One-time repack (transpose / stack / bf16 cast) outside the per-call path."""
    H = hidden_size
    G = 4 * H
    packed = {"layers": []}
    for li, lp in enumerate(params["rnn"]):
        wf = jnp.transpose(lp["fwd"]["w_ih"])              # (I, 4H)
        wb = jnp.transpose(lp["bwd"]["w_ih"])              # (I, 4H)
        if li == 0:
            w_in = jnp.stack([wf, wb], axis=0).astype(jnp.bfloat16)     # (2, N, 4H)
        else:
            # Split the 2H input rows into [fwd-half, bwd-half] pieces so the
            # previous layer never has to concatenate its two directions.
            w_in = jnp.stack([
                jnp.stack([wf[0:H], wf[H:2 * H]], axis=0),
                jnp.stack([wb[0:H], wb[H:2 * H]], axis=0),
            ], axis=0).astype(jnp.bfloat16)                             # (2, 2, H, 4H)
        b_in = jnp.stack([
            (lp["fwd"]["b_ih"] + lp["fwd"]["b_hh"]).reshape(1, G),
            (lp["bwd"]["b_ih"] + lp["bwd"]["b_hh"]).reshape(1, G),
        ], axis=0).astype(jnp.float32)                                  # (2, 1, 4H)
        w_hh = jnp.stack([jnp.transpose(lp["fwd"]["w_hh"]),
                          jnp.transpose(lp["bwd"]["w_hh"])],
                         axis=0).astype(jnp.bfloat16)                   # (2, H, 4H)
        packed["layers"].append({"w_in": w_in, "b_in": b_in, "w_hh": w_hh})
    hw = jnp.transpose(params["head_w"])                   # (2H, S*N)
    packed["head_w"] = jnp.stack([hw[0:H], hw[H:2 * H]],
                                 axis=0).astype(jnp.bfloat16)           # (2, H, S*N)
    packed["head_b"] = params["head_b"].reshape(1, -1).astype(jnp.float32)
    return packed


# ----------------------------------------------------------------------------
# Forward pass (semantics of Separator.forward).
# ----------------------------------------------------------------------------
def separator_forward(packed, x, *, num_layers, n_sources):
    """x: (B, K, N) -> (B, K, n_sources, N), softmax over the last dim."""
    B, K, N = x.shape
    M = K * B
    H = packed["layers"][0]["w_hh"].shape[1]
    G = 4 * H
    # Time-major ONCE for the whole RNN stack (one transpose in, one out).
    x_kbn = jnp.transpose(x, (1, 0, 2)).astype(jnp.bfloat16)           # (K, B, N)
    h_stack = None
    skip = None
    for li in range(num_layers):
        lp = packed["layers"][li]
        if li == 0:
            skip_new = x_kbn
            xp = proj_single(x_kbn.reshape(M, N), lp["w_in"], lp["b_in"])    # (2, M, G)
        else:
            skip_new = h_stack
            xp = proj_pair(h_stack.reshape(2, M, H), lp["w_in"], lp["b_in"])  # (2, M, G)
        h_stack = bilstm_recurrence(xp.reshape(2, K, B, G), lp["w_hh"])       # (2, K, B, H)
        # rnn_layers_activation='Identity' -> no-op.
        if li - 3 >= 1:   # dead for num_layers <= 4; kept for parity with the reference
            h_stack = h_stack + skip
        skip = skip_new
    probs = head_softmax(h_stack.reshape(2, M, H),
                         packed["head_w"], packed["head_b"], n_sources, N)    # (M, S*N)
    out = probs.reshape(K, B, n_sources, N)
    return jnp.transpose(out, (1, 0, 2, 3))                # back to batch-first


# ----------------------------------------------------------------------------
if __name__ == "__main__":
    # Small shapes consistent with the module: x is B x K x N.
    B, K, N = 2, 8, 16          # batch, sequence length, input_size
    HIDDEN = 32
    NUM_LAYERS = 4
    N_SOURCES = 2

    key = jax.random.PRNGKey(0)
    pkey, xkey = jax.random.split(key)
    params = init_separator_params(pkey, N, HIDDEN, NUM_LAYERS, N_SOURCES)
    packed = pack_separator_params(params, HIDDEN)        # one-time, outside jit
    x = jax.random.normal(xkey, (B, K, N), dtype=jnp.float32)

    fwd = jax.jit(functools.partial(separator_forward,
                                    num_layers=NUM_LAYERS, n_sources=N_SOURCES))
    out = jax.block_until_ready(fwd(packed, x))

    assert out.shape == (B, K, N_SOURCES, N), out.shape
    assert bool(jnp.all(jnp.isfinite(out))), "non-finite output"
    # Softmax over the last dim with exact normalization: sums == 1 to f32 precision.
    sums = jnp.sum(out, axis=-1)
    assert bool(jnp.allclose(sums, 1.0, atol=1e-4)), "softmax normalization failed"
    print("KERNEL_OK")
</pallas_src>

<mosaic_0001>
module attributes {stable_mosaic.version = 11 : i64} {
  func.func @_proj_single_kernel(%arg0: i32, %arg1: i32, %arg2: memref<16x16xbf16, #tpu.memory_space<vmem>>, %arg3: memref<1x16x128xbf16, #tpu.memory_space<vmem>>, %arg4: memref<1x1x128xf32, #tpu.memory_space<vmem>>, %arg5: memref<1x16x128xbf16, #tpu.memory_space<vmem>>) attributes {dimension_semantics = [#tpu.dimension_semantics<parallel>, #tpu.dimension_semantics<arbitrary>], iteration_bounds = array<i64: 1, 2>, scalar_prefetch = 0 : i64, scratch_operands = 0 : i64, tpu.core_type = #tpu.core_type<tc>, window_params = [{transform_indices = @transform_0, window_bounds = array<i64: 16, 16>}, {transform_indices = @transform_1, window_bounds = array<i64: 1, 16, 128>}, {transform_indices = @transform_2, window_bounds = array<i64: 1, 1, 128>}, {transform_indices = @transform_3, window_bounds = array<i64: 1, 16, 128>}]} {
    %c0 = arith.constant 0 : index
    %c0_0 = arith.constant 0 : index
    %0 = vector.load %arg2[%c0, %c0_0] : memref<16x16xbf16, #tpu.memory_space<vmem>>, vector<16x16xbf16>
    %c0_1 = arith.constant 0 : index
    %c0_2 = arith.constant 0 : index
    %c0_3 = arith.constant 0 : index
    %1 = vector.load %arg3[%c0_1, %c0_2, %c0_3] : memref<1x16x128xbf16, #tpu.memory_space<vmem>>, vector<1x16x128xbf16>
    %2 = vector.shape_cast %1 : vector<1x16x128xbf16> to vector<16x128xbf16>
    %cst = arith.constant dense<0.000000e+00> : vector<16x128xf32>
    %3 = tpu.matmul %0, %2, %cst {dimension_numbers = #tpu.dot_dimension_numbers<[1], [0], [0], [1], [0, 0, 1, 1], [], []>} : vector<16x16xbf16>, vector<16x128xbf16>, vector<16x128xf32> -> vector<16x128xf32>
    %c0_4 = arith.constant 0 : index
    %c0_5 = arith.constant 0 : index
    %c0_6 = arith.constant 0 : index
    %4 = vector.load %arg4[%c0_4, %c0_5, %c0_6] : memref<1x1x128xf32, #tpu.memory_space<vmem>>, vector<1x1x128xf32>
    %5 = vector.shape_cast %4 : vector<1x1x128xf32> to vector<1x128xf32>
    %6 = vector.broadcast %5 : vector<1x128xf32> to vector<16x128xf32>
    %7 = arith.addf %3, %6 : vector<16x128xf32>
    %8 = arith.truncf %7 : vector<16x128xf32> to vector<16x128xbf16>
    %c0_7 = arith.constant 0 : index
    %c0_8 = arith.constant 0 : index
    %c0_9 = arith.constant 0 : index
    %9 = vector.load %arg5[%c0_7, %c0_8, %c0_9] : memref<1x16x128xbf16, #tpu.memory_space<vmem>>, vector<1x16x128xbf16>
    %10 = vector.shape_cast %9 : vector<1x16x128xbf16> to vector<16x128xbf16>
    %11 = vector.shape_cast %8 : vector<16x128xbf16> to vector<1x16x128xbf16>
    tpu.vector_store %arg5[%c0_7, %c0_8, %c0_9], %11 {strides = array<i32>} : memref<1x16x128xbf16, #tpu.memory_space<vmem>>, vector<1x16x128xbf16>,
    return
  }
  func.func @transform_0(%arg0: i32, %arg1: i32) -> (i32, i32) {
    %c0_i32 = arith.constant 0 : i32
    %c0_i32_0 = arith.constant 0 : i32
    return %arg0, %c0_i32 : i32, i32
  }
  func.func @transform_1(%arg0: i32, %arg1: i32) -> (i32, i32, i32) {
    %c0_i32 = arith.constant 0 : i32
    %c0_i32_0 = arith.constant 0 : i32
    %c0_i32_1 = arith.constant 0 : i32
    return %arg1, %c0_i32, %c0_i32_0 : i32, i32, i32
  }
  func.func @transform_2(%arg0: i32, %arg1: i32) -> (i32, i32, i32) {
    %c0_i32 = arith.constant 0 : i32
    %c0_i32_0 = arith.constant 0 : i32
    %c0_i32_1 = arith.constant 0 : i32
    return %arg1, %c0_i32, %c0_i32_0 : i32, i32, i32
  }
  func.func @transform_3(%arg0: i32, %arg1: i32) -> (i32, i32, i32) {
    %c0_i32 = arith.constant 0 : i32
    %c0_i32_0 = arith.constant 0 : i32
    return %arg1, %arg0, %c0_i32 : i32, i32, i32
  }
}

module attributes {stable_mosaic.version = 11 : i64} {
  func.func @_bilstm_recur_kernel(%arg0: i32, %arg1: memref<1x8x2x128xbf16, #tpu.memory_space<vmem>>, %arg2: memref<1x32x128xbf16, #tpu.memory_space<vmem>>, %arg3: memref<1x8x2x32xbf16, #tpu.memory_space<vmem>>) attributes {dimension_semantics = [#tpu.dimension_semantics<parallel>], iteration_bounds = array<i64: 2>, scalar_prefetch = 0 : i64, scratch_operands = 0 : i64, tpu.core_type = #tpu.core_type<tc>, window_params = [{transform_indices = @transform_0, window_bounds = array<i64: 1, 8, 2, 128>}, {transform_indices = @transform_1, window_bounds = array<i64: 1, 32, 128>}, {transform_indices = @transform_2, window_bounds = array<i64: 1, 8, 2, 32>}]} {
    %c1_i32 = arith.constant 1 : i32
    %0 = arith.cmpi eq, %arg0, %c1_i32 : i32
    %cst = arith.constant 0.000000e+00 : f32
    %1 = vector.broadcast %cst : f32 to vector<2x32xf32>
    %cst_0 = arith.constant 0.000000e+00 : f32
    %2 = vector.broadcast %cst_0 : f32 to vector<2x32xf32>
    %c0_i32 = arith.constant 0 : i32
    %c7_i32 = arith.constant 7 : i32
    %3 = arith.subi %c7_i32, %c0_i32 : i32
    %4 = arith.select %0, %3, %c0_i32 : i32
    %c0 = arith.constant 0 : index
    %5 = arith.index_cast %4 : i32 to index
    %c0_1 = arith.constant 0 : index
    %c0_2 = arith.constant 0 : index
    %6 = vector.load %arg1[%c0, %5, %c0_1, %c0_2] : memref<1x8x2x128xbf16, #tpu.memory_space<vmem>>, vector<1x1x2x128xbf16>
    %7 = vector.shape_cast %6 : vector<1x1x2x128xbf16> to vector<2x128xbf16>
    %8 = arith.extf %7 : vector<2x128xbf16> to vector<2x128xf32>
    %9 = arith.truncf %1 : vector<2x32xf32> to vector<2x32xbf16>
    %c0_3 = arith.constant 0 : index
    %c0_4 = arith.constant 0 : index
    %c0_5 = arith.constant 0 : index
    %10 = vector.load %arg2[%c0_3, %c0_4, %c0_5] : memref<1x32x128xbf16, #tpu.memory_space<vmem>>, vector<1x32x128xbf16>
    %11 = vector.shape_cast %10 : vector<1x32x128xbf16> to vector<32x128xbf16>
    %cst_6 = arith.constant dense<0.000000e+00> : vector<2x128xf32>
    %12 = tpu.matmul %9, %11, %cst_6 {dimension_numbers = #tpu.dot_dimension_numbers<[1], [0], [0], [1], [0, 0, 1, 1], [], []>} : vector<2x32xbf16>, vector<32x128xbf16>, vector<2x128xf32> -> vector<2x128xf32>
    %13 = arith.addf %8, %12 : vector<2x128xf32>
    %14 = vector.extract_strided_slice %13 {offsets = [0, 0], sizes = [2, 64], strides = [1, 1]} : vector<2x128xf32> to vector<2x64xf32>
    %15 = arith.negf %14 : vector<2x64xf32>
    %16 = math.exp %15 : vector<2x64xf32>
    %cst_7 = arith.constant 1.000000e+00 : f32
    %17 = vector.broadcast %cst_7 : f32 to vector<2x64xf32>
    %18 = arith.addf %17, %16 : vector<2x64xf32>
    %19 = arith.divf %17, %18 : vector<2x64xf32>
    %20 = vector.extract_strided_slice %13 {offsets = [0, 64], sizes = [2, 32], strides = [1, 1]} : vector<2x128xf32> to vector<2x32xf32>
    %21 = math.tanh %20 : vector<2x32xf32>
    %22 = vector.extract_strided_slice %13 {offsets = [0, 96], sizes = [2, 32], strides = [1, 1]} : vector<2x128xf32> to vector<2x32xf32>
    %23 = arith.negf %22 : vector<2x32xf32>
    %24 = math.exp %23 : vector<2x32xf32>
    %cst_8 = arith.constant 1.000000e+00 : f32
    %25 = vector.broadcast %cst_8 : f32 to vector<2x32xf32>
    %26 = arith.addf %25, %24 : vector<2x32xf32>
    %27 = arith.divf %25, %26 : vector<2x32xf32>
    %28 = vector.extract_strided_slice %19 {offsets = [0, 32], sizes = [2, 32], strides = [1, 1]} : vector<2x64xf32> to vector<2x32xf32>
    %29 = arith.mulf %28, %2 : vector<2x32xf32>
    %30 = vector.extract_strided_slice %19 {offsets = [0, 0], sizes = [2, 32], strides = [1, 1]} : vector<2x64xf32> to vector<2x32xf32>
    %31 = arith.mulf %30, %21 : vector<2x32xf32>
    %32 = arith.addf %29, %31 : vector<2x32xf32>
    %33 = math.tanh %32 : vector<2x32xf32>
    %34 = arith.mulf %27, %33 : vector<2x32xf32>
    %35 = arith.truncf %34 : vector<2x32xf32> to vector<2x32xbf16>
    %c0_9 = arith.constant 0 : index
    %36 = arith.index_cast %4 : i32 to index
    %c0_10 = arith.constant 0 : index
    %c0_11 = arith.constant 0 : index
    %37 = vector.load %arg3[%c0_9, %36, %c0_10, %c0_11] : memref<1x8x2x32xbf16, #tpu.memory_space<vmem>>, vector<1x1x2x32xbf16>
    %38 = vector.shape_cast %37 : vector<1x1x2x32xbf16> to vector<2x32xbf16>
    %39 = vector.shape_cast %35 : vector<2x32xbf16> to vector<1x1x2x32xbf16>
    tpu.vector_store %arg3[%c0_9, %36, %c0_10, %c0_11], %39 {strides = array<i32>} : memref<1x8x2x32xbf16, #tpu.memory_space<vmem>>, vector<1x1x2x32xbf16>,
    %c1_i32_12 = arith.constant 1 : i32
    %c7_i32_13 = arith.constant 7 : i32
    %40 = arith.subi %c7_i32_13, %c1_i32_12 : i32
    %41 = arith.select %0, %40, %c1_i32_12 : i32
    %c0_14 = arith.constant 0 : index
    %42 = arith.index_cast %41 : i32 to index
    %c0_15 = arith.constant 0 : index
    %c0_16 = arith.constant 0 : index
    %43 = vector.load %arg1[%c0_14, %42, %c0_15, %c0_16] : memref<1x8x2x128xbf16, #tpu.memory_space<vmem>>, vector<1x1x2x128xbf16>
    %44 = vector.shape_cast %43 : vector<1x1x2x128xbf16> to vector<2x128xbf16>
    %45 = arith.extf %44 : vector<2x128xbf16> to vector<2x128xf32>
    %46 = arith.truncf %34 : vector<2x32xf32> to vector<2x32xbf16>
    %c0_17 = arith.constant 0 : index
    %c0_18 = arith.constant 0 : index
    %c0_19 = arith.constant 0 : index
    %47 = vector.load %arg2[%c0_17, %c0_18, %c0_19] : memref<1x32x128xbf16, #tpu.memory_space<vmem>>, vector<1x32x128xbf16>
    %48 = vector.shape_cast %47 : vector<1x32x128xbf16> to vector<32x128xbf16>
    %cst_20 = arith.constant dense<0.000000e+00> : vector<2x128xf32>
    %49 = tpu.matmul %46, %48, %cst_20 {dimension_numbers = #tpu.dot_dimension_numbers<[1], [0], [0], [1], [0, 0, 1, 1], [], []>} : vector<2x32xbf16>, vector<32x128xbf16>, vector<2x128xf32> -> vector<2x128xf32>
    %50 = arith.addf %45, %49 : vector<2x128xf32>
    %51 = vector.extract_strided_slice %50 {offsets = [0, 0], sizes = [2, 64], strides = [1, 1]} : vector<2x128xf32> to vector<2x64xf32>
    %52 = arith.negf %51 : vector<2x64xf32>
    %53 = math.exp %52 : vector<2x64xf32>
    %cst_21 = arith.constant 1.000000e+00 : f32
    %54 = vector.broadcast %cst_21 : f32 to vector<2x64xf32>
    %55 = arith.addf %54, %53 : vector<2x64xf32>
    %56 = arith.divf %54, %55 : vector<2x64xf32>
    %57 = vector.extract_strided_slice %50 {offsets = [0, 64], sizes = [2, 32], strides = [1, 1]} : vector<2x128xf32> to vector<2x32xf32>
    %58 = math.tanh %57 : vector<2x32xf32>
    %59 = vector.extract_strided_slice %50 {offsets = [0, 96], sizes = [2, 32], strides = [1, 1]} : vector<2x128xf32> to vector<2x32xf32>
    %60 = arith.negf %59 : vector<2x32xf32>
    %61 = math.exp %60 : vector<2x32xf32>
    %cst_22 = arith.constant 1.000000e+00 : f32
    %62 = vector.broadcast %cst_22 : f32 to vector<2x32xf32>
    %63 = arith.addf %62, %61 : vector<2x32xf32>
    %64 = arith.divf %62, %63 : vector<2x32xf32>
    %65 = vector.extract_strided_slice %56 {offsets = [0, 32], sizes = [2, 32], strides = [1, 1]} : vector<2x64xf32> to vector<2x32xf32>
    %66 = arith.mulf %65, %32 : vector<2x32xf32>
    %67 = vector.extract_strided_slice %56 {offsets = [0, 0], sizes = [2, 32], strides = [1, 1]} : vector<2x64xf32> to vector<2x32xf32>
    %68 = arith.mulf %67, %58 : vector<2x32xf32>
    %69 = arith.addf %66, %68 : vector<2x32xf32>
    %70 = math.tanh %69 : vector<2x32xf32>
    %71 = arith.mulf %64, %70 : vector<2x32xf32>
    %72 = arith.truncf %71 : vector<2x32xf32> to vector<2x32xbf16>
    %c0_23 = arith.constant 0 : index
    %73 = arith.index_cast %41 : i32 to index
    %c0_24 = arith.constant 0 : index
    %c0_25 = arith.constant 0 : index
    %74 = vector.load %arg3[%c0_23, %73, %c0_24, %c0_25] : memref<1x8x2x32xbf16, #tpu.memory_space<vmem>>, vector<1x1x2x32xbf16>
    %75 = vector.shape_cast %74 : vector<1x1x2x32xbf16> to vector<2x32xbf16>
    %76 = vector.shape_cast %72 : vector<2x32xbf16> to vector<1x1x2x32xbf16>
    tpu.vector_store %arg3[%c0_23, %73, %c0_24, %c0_25], %76 {strides = array<i32>} : memref<1x8x2x32xbf16, #tpu.memory_space<vmem>>, vector<1x1x2x32xbf16>,
    %c2_i32 = arith.constant 2 : i32
    %c7_i32_26 = arith.constant 7 : i32
    %77 = arith.subi %c7_i32_26, %c2_i32 : i32
    %78 = arith.select %0, %77, %c2_i32 : i32
    %c0_27 = arith.constant 0 : index
    %79 = arith.index_cast %78 : i32 to index
    %c0_28 = arith.constant 0 : index
    %c0_29 = arith.constant 0 : index
    %80 = vector.load %arg1[%c0_27, %79, %c0_28, %c0_29] : memref<1x8x2x128xbf16, #tpu.memory_space<vmem>>, vector<1x1x2x128xbf16>
    %81 = vector.shape_cast %80 : vector<1x1x2x128xbf16> to vector<2x128xbf16>
    %82 = arith.extf %81 : vector<2x128xbf16> to vector<2x128xf32>
    %83 = arith.truncf %71 : vector<2x32xf32> to vector<2x32xbf16>
    %c0_30 = arith.constant 0 : index
    %c0_31 = arith.constant 0 : index
    %c0_32 = arith.constant 0 : index
    %84 = vector.load %arg2[%c0_30, %c0_31, %c0_32] : memref<1x32x128xbf16, #tpu.memory_space<vmem>>, vector<1x32x128xbf16>
    %85 = vector.shape_cast %84 : vector<1x32x128xbf16> to vector<32x128xbf16>
    %cst_33 = arith.constant dense<0.000000e+00> : vector<2x128xf32>
    %86 = tpu.matmul %83, %85, %cst_33 {dimension_numbers = #tpu.dot_dimension_numbers<[1], [0], [0], [1], [0, 0, 1, 1], [], []>} : vector<2x32xbf16>, vector<32x128xbf16>, vector<2x128xf32> -> vector<2x128xf32>
    %87 = arith.addf %82, %86 : vector<2x128xf32>
    %88 = vector.extract_strided_slice %87 {offsets = [0, 0], sizes = [2, 64], strides = [1, 1]} : vector<2x128xf32> to vector<2x64xf32>
    %89 = arith.negf %88 : vector<2x64xf32>
    %90 = math.exp %89 : vector<2x64xf32>
    %cst_34 = arith.constant 1.000000e+00 : f32
    %91 = vector.broadcast %cst_34 : f32 to vector<2x64xf32>
    %92 = arith.addf %91, %90 : vector<2x64xf32>
    %93 = arith.divf %91, %92 : vector<2x64xf32>
    %94 = vector.extract_strided_slice %87 {offsets = [0, 64], sizes = [2, 32], strides = [1, 1]} : vector<2x128xf32> to vector<2x32xf32>
    %95 = math.tanh %94 : vector<2x32xf32>
    %96 = vector.extract_strided_slice %87 {offsets = [0, 96], sizes = [2, 32], strides = [1, 1]} : vector<2x128xf32> to vector<2x32xf32>
    %97 = arith.negf %96 : vector<2x32xf32>
    %98 = math.exp %97 : vector<2x32xf32>
    %cst_35 = arith.constant 1.000000e+00 : f32
    %99 = vector.broadcast %cst_35 : f32 to vector<2x32xf32>
    %100 = arith.addf %99, %98 : vector<2x32xf32>
    %101 = arith.divf %99, %100 : vector<2x32xf32>
    %102 = vector.extract_strided_slice %93 {offsets = [0, 32], sizes = [2, 32], strides = [1, 1]} : vector<2x64xf32> to vector<2x32xf32>
    %103 = arith.mulf %102, %69 : vector<2x32xf32>
    %104 = vector.extract_strided_slice %93 {offsets = [0, 0], sizes = [2, 32], strides = [1, 1]} : vector<2x64xf32> to vector<2x32xf32>
    %105 = arith.mulf %104, %95 : vector<2x32xf32>
    %106 = arith.addf %103, %105 : vector<2x32xf32>
    %107 = math.tanh %106 : vector<2x32xf32>
    %108 = arith.mulf %101, %107 : vector<2x32xf32>
    %109 = arith.truncf %108 : vector<2x32xf32> to vector<2x32xbf16>
    %c0_36 = arith.constant 0 : index
    %110 = arith.index_cast %78 : i32 to index
    %c0_37 = arith.constant 0 : index
    %c0_38 = arith.constant 0 : index
    %111 = vector.load %arg3[%c0_36, %110, %c0_37, %c0_38] : memref<1x8x2x32xbf16, #tpu.memory_space<vmem>>, vector<1x1x2x32xbf16>
    %112 = vector.shape_cast %111 : vector<1x1x2x32xbf16> to vector<2x32xbf16>
    %113 = vector.shape_cast %109 : vector<2x32xbf16> to vector<1x1x2x32xbf16>
    tpu.vector_store %arg3[%c0_36, %110, %c0_37, %c0_38], %113 {strides = array<i32>} : memref<1x8x2x32xbf16, #tpu.memory_space<vmem>>, vector<1x1x2x32xbf16>,
    %c3_i32 = arith.constant 3 : i32
    %c7_i32_39 = arith.constant 7 : i32
    %114 = arith.subi %c7_i32_39, %c3_i32 : i32
    %115 = arith.select %0, %114, %c3_i32 : i32
    %c0_40 = arith.constant 0 : index
    %116 = arith.index_cast %115 : i32 to index
    %c0_41 = arith.constant 0 : index
    %c0_42 = arith.constant 0 : index
    %117 = vector.load %arg1[%c0_40, %116, %c0_41, %c0_42] : memref<1x8x2x128xbf16, #tpu.memory_space<vmem>>, vector<1x1x2x128xbf16>
    %118 = vector.shape_cast %117 : vector<1x1x2x128xbf16> to vector<2x128xbf16>
    %119 = arith.extf %118 : vector<2x128xbf16> to vector<2x128xf32>
    %120 = arith.truncf %108 : vector<2x32xf32> to vector<2x32xbf16>
    %c0_43 = arith.constant 0 : index
    %c0_44 = arith.constant 0 : index
    %c0_45 = arith.constant 0 : index
    %121 = vector.load %arg2[%c0_43, %c0_44, %c0_45] : memref<1x32x128xbf16, #tpu.memory_space<vmem>>, vector<1x32x128xbf16>
    %122 = vector.shape_cast %121 : vector<1x32x128xbf16> to vector<32x128xbf16>
    %cst_46 = arith.constant dense<0.000000e+00> : vector<2x128xf32>
    %123 = tpu.matmul %120, %122, %cst_46 {dimension_numbers = #tpu.dot_dimension_numbers<[1], [0], [0], [1], [0, 0, 1, 1], [], []>} : vector<2x32xbf16>, vector<32x128xbf16>, vector<2x128xf32> -> vector<2x128xf32>
    %124 = arith.addf %119, %123 : vector<2x128xf32>
    %125 = vector.extract_strided_slice %124 {offsets = [0, 0], sizes = [2, 64], strides = [1, 1]} : vector<2x128xf32> to vector<2x64xf32>
    %126 = arith.negf %125 : vector<2x64xf32>
    %127 = math.exp %126 : vector<2x64xf32>
    %cst_47 = arith.constant 1.000000e+00 : f32
    %128 = vector.broadcast %cst_47 : f32 to vector<2x64xf32>
    %129 = arith.addf %128, %127 : vector<2x64xf32>
    %130 = arith.divf %128, %129 : vector<2x64xf32>
    %131 = vector.extract_strided_slice %124 {offsets = [0, 64], sizes = [2, 32], strides = [1, 1]} : vector<2x128xf32> to vector<2x32xf32>
    %132 = math.tanh %131 : vector<2x32xf32>
    %133 = vector.extract_strided_slice %124 {offsets = [0, 96], sizes = [2, 32], strides = [1, 1]} : vector<2x128xf32> to vector<2x32xf32>
    %134 = arith.negf %133 : vector<2x32xf32>
    %135 = math.exp %134 : vector<2x32xf32>
    %cst_48 = arith.constant 1.000000e+00 : f32
    %136 = vector.broadcast %cst_48 : f32 to vector<2x32xf32>
    %137 = arith.addf %136, %135 : vector<2x32xf32>
    %138 = arith.divf %136, %137 : vector<2x32xf32>
    %139 = vector.extract_strided_slice %130 {offsets = [0, 32], sizes = [2, 32], strides = [1, 1]} : vector<2x64xf32> to vector<2x32xf32>
    %140 = arith.mulf %139, %106 : vector<2x32xf32>
    %141 = vector.extract_strided_slice %130 {offsets = [0, 0], sizes = [2, 32], strides = [1, 1]} : vector<2x64xf32> to vector<2x32xf32>
    %142 = arith.mulf %141, %132 : vector<2x32xf32>
    %143 = arith.addf %140, %142 : vector<2x32xf32>
    %144 = math.tanh %143 : vector<2x32xf32>
    %145 = arith.mulf %138, %144 : vector<2x32xf32>
    %146 = arith.truncf %145 : vector<2x32xf32> to vector<2x32xbf16>
    %c0_49 = arith.constant 0 : index
    %147 = arith.index_cast %115 : i32 to index
    %c0_50 = arith.constant 0 : index
    %c0_51 = arith.constant 0 : index
    %148 = vector.load %arg3[%c0_49, %147, %c0_50, %c0_51] : memref<1x8x2x32xbf16, #tpu.memory_space<vmem>>, vector<1x1x2x32xbf16>
    %149 = vector.shape_cast %148 : vector<1x1x2x32xbf16> to vector<2x32xbf16>
    %150 = vector.shape_cast %146 : vector<2x32xbf16> to vector<1x1x2x32xbf16>
    tpu.vector_store %arg3[%c0_49, %147, %c0_50, %c0_51], %150 {strides = array<i32>} : memref<1x8x2x32xbf16, #tpu.memory_space<vmem>>, vector<1x1x2x32xbf16>,
    %c4_i32 = arith.constant 4 : i32
    %c7_i32_52 = arith.constant 7 : i32
    %151 = arith.subi %c7_i32_52, %c4_i32 : i32
    %152 = arith.select %0, %151, %c4_i32 : i32
    %c0_53 = arith.constant 0 : index
    %153 = arith.index_cast %152 : i32 to index
    %c0_54 = arith.constant 0 : index
    %c0_55 = arith.constant 0 : index
    %154 = vector.load %arg1[%c0_53, %153, %c0_54, %c0_55] : memref<1x8x2x128xbf16, #tpu.memory_space<vmem>>, vector<1x1x2x128xbf16>
    %155 = vector.shape_cast %154 : vector<1x1x2x128xbf16> to vector<2x128xbf16>
    %156 = arith.extf %155 : vector<2x128xbf16> to vector<2x128xf32>
    %157 = arith.truncf %145 : vector<2x32xf32> to vector<2x32xbf16>
    %c0_56 = arith.constant 0 : index
    %c0_57 = arith.constant 0 : index
    %c0_58 = arith.constant 0 : index
    %158 = vector.load %arg2[%c0_56, %c0_57, %c0_58] : memref<1x32x128xbf16, #tpu.memory_space<vmem>>, vector<1x32x128xbf16>
    %159 = vector.shape_cast %158 : vector<1x32x128xbf16> to vector<32x128xbf16>
    %cst_59 = arith.constant dense<0.000000e+00> : vector<2x128xf32>
    %160 = tpu.matmul %157, %159, %cst_59 {dimension_numbers = #tpu.dot_dimension_numbers<[1], [0], [0], [1], [0, 0, 1, 1], [], []>} : vector<2x32xbf16>, vector<32x128xbf16>, vector<2x128xf32> -> vector<2x128xf32>
    %161 = arith.addf %156, %160 : vector<2x128xf32>
    %162 = vector.extract_strided_slice %161 {offsets = [0, 0], sizes = [2, 64], strides = [1, 1]} : vector<2x128xf32> to vector<2x64xf32>
    %163 = arith.negf %162 : vector<2x64xf32>
    %164 = math.exp %163 : vector<2x64xf32>
    %cst_60 = arith.constant 1.000000e+00 : f32
    %165 = vector.broadcast %cst_60 : f32 to vector<2x64xf32>
    %166 = arith.addf %165, %164 : vector<2x64xf32>
    %167 = arith.divf %165, %166 : vector<2x64xf32>
    %168 = vector.extract_strided_slice %161 {offsets = [0, 64], sizes = [2, 32], strides = [1, 1]} : vector<2x128xf32> to vector<2x32xf32>
    %169 = math.tanh %168 : vector<2x32xf32>
    %170 = vector.extract_strided_slice %161 {offsets = [0, 96], sizes = [2, 32], strides = [1, 1]} : vector<2x128xf32> to vector<2x32xf32>
    %171 = arith.negf %170 : vector<2x32xf32>
    %172 = math.exp %171 : vector<2x32xf32>
    %cst_61 = arith.constant 1.000000e+00 : f32
    %173 = vector.broadcast %cst_61 : f32 to vector<2x32xf32>
    %174 = arith.addf %173, %172 : vector<2x32xf32>
    %175 = arith.divf %173, %174 : vector<2x32xf32>
    %176 = vector.extract_strided_slice %167 {offsets = [0, 32], sizes = [2, 32], strides = [1, 1]} : vector<2x64xf32> to vector<2x32xf32>
    %177 = arith.mulf %176, %143 : vector<2x32xf32>
    %178 = vector.extract_strided_slice %167 {offsets = [0, 0], sizes = [2, 32], strides = [1, 1]} : vector<2x64xf32> to vector<2x32xf32>
    %179 = arith.mulf %178, %169 : vector<2x32xf32>
    %180 = arith.addf %177, %179 : vector<2x32xf32>
    %181 = math.tanh %180 : vector<2x32xf32>
    %182 = arith.mulf %175, %181 : vector<2x32xf32>
    %183 = arith.truncf %182 : vector<2x32xf32> to vector<2x32xbf16>
    %c0_62 = arith.constant 0 : index
    %184 = arith.index_cast %152 : i32 to index
    %c0_63 = arith.constant 0 : index
    %c0_64 = arith.constant 0 : index
    %185 = vector.load %arg3[%c0_62, %184, %c0_63, %c0_64] : memref<1x8x2x32xbf16, #tpu.memory_space<vmem>>, vector<1x1x2x32xbf16>
    %186 = vector.shape_cast %185 : vector<1x1x2x32xbf16> to vector<2x32xbf16>
    %187 = vector.shape_cast %183 : vector<2x32xbf16> to vector<1x1x2x32xbf16>
    tpu.vector_store %arg3[%c0_62, %184, %c0_63, %c0_64], %187 {strides = array<i32>} : memref<1x8x2x32xbf16, #tpu.memory_space<vmem>>, vector<1x1x2x32xbf16>,
    %c5_i32 = arith.constant 5 : i32
    %c7_i32_65 = arith.constant 7 : i32
    %188 = arith.subi %c7_i32_65, %c5_i32 : i32
    %189 = arith.select %0, %188, %c5_i32 : i32
    %c0_66 = arith.constant 0 : index
    %190 = arith.index_cast %189 : i32 to index
    %c0_67 = arith.constant 0 : index
    %c0_68 = arith.constant 0 : index
    %191 = vector.load %arg1[%c0_66, %190, %c0_67, %c0_68] : memref<1x8x2x128xbf16, #tpu.memory_space<vmem>>, vector<1x1x2x128xbf16>
    %192 = vector.shape_cast %191 : vector<1x1x2x128xbf16> to vector<2x128xbf16>
    %193 = arith.extf %192 : vector<2x128xbf16> to vector<2x128xf32>
    %194 = arith.truncf %182 : vector<2x32xf32> to vector<2x32xbf16>
    %c0_69 = arith.constant 0 : index
    %c0_70 = arith.constant 0 : index
    %c0_71 = arith.constant 0 : index
    %195 = vector.load %arg2[%c0_69, %c0_70, %c0_71] : memref<1x32x128xbf16, #tpu.memory_space<vmem>>, vector<1x32x128xbf16>
    %196 = vector.shape_cast %195 : vector<1x32x128xbf16> to vector<32x128xbf16>
    %cst_72 = arith.constant dense<0.000000e+00> : vector<2x128xf32>
    %197 = tpu.matmul %194, %196, %cst_72 {dimension_numbers = #tpu.dot_dimension_numbers<[1], [0], [0], [1], [0, 0, 1, 1], [], []>} : vector<2x32xbf16>, vector<32x128xbf16>, vector<2x128xf32> -> vector<2x128xf32>
    %198 = arith.addf %193, %197 : vector<2x128xf32>
    %199 = vector.extract_strided_slice %198 {offsets = [0, 0], sizes = [2, 64], strides = [1, 1]} : vector<2x128xf32> to vector<2x64xf32>
    %200 = arith.negf %199 : vector<2x64xf32>
    %201 = math.exp %200 : vector<2x64xf32>
    %cst_73 = arith.constant 1.000000e+00 : f32
    %202 = vector.broadcast %cst_73 : f32 to vector<2x64xf32>
    %203 = arith.addf %202, %201 : vector<2x64xf32>
    %204 = arith.divf %202, %203 : vector<2x64xf32>
    %205 = vector.extract_strided_slice %198 {offsets = [0, 64], sizes = [2, 32], strides = [1, 1]} : vector<2x128xf32> to vector<2x32xf32>
    %206 = math.tanh %205 : vector<2x32xf32>
    %207 = vector.extract_strided_slice %198 {offsets = [0, 96], sizes = [2, 32], strides = [1, 1]} : vector<2x128xf32> to vector<2x32xf32>
    %208 = arith.negf %207 : vector<2x32xf32>
    %209 = math.exp %208 : vector<2x32xf32>
    %cst_74 = arith.constant 1.000000e+00 : f32
    %210 = vector.broadcast %cst_74 : f32 to vector<2x32xf32>
    %211 = arith.addf %210, %209 : vector<2x32xf32>
    %212 = arith.divf %210, %211 : vector<2x32xf32>
    %213 = vector.extract_strided_slice %204 {offsets = [0, 32], sizes = [2, 32], strides = [1, 1]} : vector<2x64xf32> to vector<2x32xf32>
    %214 = arith.mulf %213, %180 : vector<2x32xf32>
    %215 = vector.extract_strided_slice %204 {offsets = [0, 0], sizes = [2, 32], strides = [1, 1]} : vector<2x64xf32> to vector<2x32xf32>
    %216 = arith.mulf %215, %206 : vector<2x32xf32>
    %217 = arith.addf %214, %216 : vector<2x32xf32>
    %218 = math.tanh %217 : vector<2x32xf32>
    %219 = arith.mulf %212, %218 : vector<2x32xf32>
    %220 = arith.truncf %219 : vector<2x32xf32> to vector<2x32xbf16>
    %c0_75 = arith.constant 0 : index
    %221 = arith.index_cast %189 : i32 to index
    %c0_76 = arith.constant 0 : index
    %c0_77 = arith.constant 0 : index
    %222 = vector.load %arg3[%c0_75, %221, %c0_76, %c0_77] : memref<1x8x2x32xbf16, #tpu.memory_space<vmem>>, vector<1x1x2x32xbf16>
    %223 = vector.shape_cast %222 : vector<1x1x2x32xbf16> to vector<2x32xbf16>
    %224 = vector.shape_cast %220 : vector<2x32xbf16> to vector<1x1x2x32xbf16>
    tpu.vector_store %arg3[%c0_75, %221, %c0_76, %c0_77], %224 {strides = array<i32>} : memref<1x8x2x32xbf16, #tpu.memory_space<vmem>>, vector<1x1x2x32xbf16>,
    %c6_i32 = arith.constant 6 : i32
    %c7_i32_78 = arith.constant 7 : i32
    %225 = arith.subi %c7_i32_78, %c6_i32 : i32
    %226 = arith.select %0, %225, %c6_i32 : i32
    %c0_79 = arith.constant 0 : index
    %227 = arith.index_cast %226 : i32 to index
    %c0_80 = arith.constant 0 : index
    %c0_81 = arith.constant 0 : index
    %228 = vector.load %arg1[%c0_79, %227, %c0_80, %c0_81] : memref<1x8x2x128xbf16, #tpu.memory_space<vmem>>, vector<1x1x2x128xbf16>
    %229 = vector.shape_cast %228 : vector<1x1x2x128xbf16> to vector<2x128xbf16>
    %230 = arith.extf %229 : vector<2x128xbf16> to vector<2x128xf32>
    %231 = arith.truncf %219 : vector<2x32xf32> to vector<2x32xbf16>
    %c0_82 = arith.constant 0 : index
    %c0_83 = arith.constant 0 : index
    %c0_84 = arith.constant 0 : index
    %232 = vector.load %arg2[%c0_82, %c0_83, %c0_84] : memref<1x32x128xbf16, #tpu.memory_space<vmem>>, vector<1x32x128xbf16>
    %233 = vector.shape_cast %232 : vector<1x32x128xbf16> to vector<32x128xbf16>
    %cst_85 = arith.constant dense<0.000000e+00> : vector<2x128xf32>
    %234 = tpu.matmul %231, %233, %cst_85 {dimension_numbers = #tpu.dot_dimension_numbers<[1], [0], [0], [1], [0, 0, 1, 1], [], []>} : vector<2x32xbf16>, vector<32x128xbf16>, vector<2x128xf32> -> vector<2x128xf32>
    %235 = arith.addf %230, %234 : vector<2x128xf32>
    %236 = vector.extract_strided_slice %235 {offsets = [0, 0], sizes = [2, 64], strides = [1, 1]} : vector<2x128xf32> to vector<2x64xf32>
    %237 = arith.negf %236 : vector<2x64xf32>
    %238 = math.exp %237 : vector<2x64xf32>
    %cst_86 = arith.constant 1.000000e+00 : f32
    %239 = vector.broadcast %cst_86 : f32 to vector<2x64xf32>
    %240 = arith.addf %239, %238 : vector<2x64xf32>
    %241 = arith.divf %239, %240 : vector<2x64xf32>
    %242 = vector.extract_strided_slice %235 {offsets = [0, 64], sizes = [2, 32], strides = [1, 1]} : vector<2x128xf32> to vector<2x32xf32>
    %243 = math.tanh %242 : vector<2x32xf32>
    %244 = vector.extract_strided_slice %235 {offsets = [0, 96], sizes = [2, 32], strides = [1, 1]} : vector<2x128xf32> to vector<2x32xf32>
    %245 = arith.negf %244 : vector<2x32xf32>
    %246 = math.exp %245 : vector<2x32xf32>
    %cst_87 = arith.constant 1.000000e+00 : f32
    %247 = vector.broadcast %cst_87 : f32 to vector<2x32xf32>
    %248 = arith.addf %247, %246 : vector<2x32xf32>
    %249 = arith.divf %247, %248 : vector<2x32xf32>
    %250 = vector.extract_strided_slice %241 {offsets = [0, 32], sizes = [2, 32], strides = [1, 1]} : vector<2x64xf32> to vector<2x32xf32>
    %251 = arith.mulf %250, %217 : vector<2x32xf32>
    %252 = vector.extract_strided_slice %241 {offsets = [0, 0], sizes = [2, 32], strides = [1, 1]} : vector<2x64xf32> to vector<2x32xf32>
    %253 = arith.mulf %252, %243 : vector<2x32xf32>
    %254 = arith.addf %251, %253 : vector<2x32xf32>
    %255 = math.tanh %254 : vector<2x32xf32>
    %256 = arith.mulf %249, %255 : vector<2x32xf32>
    %257 = arith.truncf %256 : vector<2x32xf32> to vector<2x32xbf16>
    %c0_88 = arith.constant 0 : index
    %258 = arith.index_cast %226 : i32 to index
    %c0_89 = arith.constant 0 : index
    %c0_90 = arith.constant 0 : index
    %259 = vector.load %arg3[%c0_88, %258, %c0_89, %c0_90] : memref<1x8x2x32xbf16, #tpu.memory_space<vmem>>, vector<1x1x2x32xbf16>
    %260 = vector.shape_cast %259 : vector<1x1x2x32xbf16> to vector<2x32xbf16>
    %261 = vector.shape_cast %257 : vector<2x32xbf16> to vector<1x1x2x32xbf16>
    tpu.vector_store %arg3[%c0_88, %258, %c0_89, %c0_90], %261 {strides = array<i32>} : memref<1x8x2x32xbf16, #tpu.memory_space<vmem>>, vector<1x1x2x32xbf16>,
    %c7_i32_91 = arith.constant 7 : i32
    %c7_i32_92 = arith.constant 7 : i32
    %262 = arith.subi %c7_i32_92, %c7_i32_91 : i32
    %263 = arith.select %0, %262, %c7_i32_91 : i32
    %c0_93 = arith.constant 0 : index
    %264 = arith.index_cast %263 : i32 to index
    %c0_94 = arith.constant 0 : index
    %c0_95 = arith.constant 0 : index
    %265 = vector.load %arg1[%c0_93, %264, %c0_94, %c0_95] : memref<1x8x2x128xbf16, #tpu.memory_space<vmem>>, vector<1x1x2x128xbf16>
    %266 = vector.shape_cast %265 : vector<1x1x2x128xbf16> to vector<2x128xbf16>
    %267 = arith.extf %266 : vector<2x128xbf16> to vector<2x128xf32>
    %268 = arith.truncf %256 : vector<2x32xf32> to vector<2x32xbf16>
    %c0_96 = arith.constant 0 : index
    %c0_97 = arith.constant 0 : index
    %c0_98 = arith.constant 0 : index
    %269 = vector.load %arg2[%c0_96, %c0_97, %c0_98] : memref<1x32x128xbf16, #tpu.memory_space<vmem>>, vector<1x32x128xbf16>
    %270 = vector.shape_cast %269 : vector<1x32x128xbf16> to vector<32x128xbf16>
    %cst_99 = arith.constant dense<0.000000e+00> : vector<2x128xf32>
    %271 = tpu.matmul %268, %270, %cst_99 {dimension_numbers = #tpu.dot_dimension_numbers<[1], [0], [0], [1], [0, 0, 1, 1], [], []>} : vector<2x32xbf16>, vector<32x128xbf16>, vector<2x128xf32> -> vector<2x128xf32>
    %272 = arith.addf %267, %271 : vector<2x128xf32>
    %273 = vector.extract_strided_slice %272 {offsets = [0, 0], sizes = [2, 64], strides = [1, 1]} : vector<2x128xf32> to vector<2x64xf32>
    %274 = arith.negf %273 : vector<2x64xf32>
    %275 = math.exp %274 : vector<2x64xf32>
    %cst_100 = arith.constant 1.000000e+00 : f32
    %276 = vector.broadcast %cst_100 : f32 to vector<2x64xf32>
    %277 = arith.addf %276, %275 : vector<2x64xf32>
    %278 = arith.divf %276, %277 : vector<2x64xf32>
    %279 = vector.extract_strided_slice %272 {offsets = [0, 64], sizes = [2, 32], strides = [1, 1]} : vector<2x128xf32> to vector<2x32xf32>
    %280 = math.tanh %279 : vector<2x32xf32>
    %281 = vector.extract_strided_slice %272 {offsets = [0, 96], sizes = [2, 32], strides = [1, 1]} : vector<2x128xf32> to vector<2x32xf32>
    %282 = arith.negf %281 : vector<2x32xf32>
    %283 = math.exp %282 : vector<2x32xf32>
    %cst_101 = arith.constant 1.000000e+00 : f32
    %284 = vector.broadcast %cst_101 : f32 to vector<2x32xf32>
    %285 = arith.addf %284, %283 : vector<2x32xf32>
    %286 = arith.divf %284, %285 : vector<2x32xf32>
    %287 = vector.extract_strided_slice %278 {offsets = [0, 32], sizes = [2, 32], strides = [1, 1]} : vector<2x64xf32> to vector<2x32xf32>
    %288 = arith.mulf %287, %254 : vector<2x32xf32>
    %289 = vector.extract_strided_slice %278 {offsets = [0, 0], sizes = [2, 32], strides = [1, 1]} : vector<2x64xf32> to vector<2x32xf32>
    %290 = arith.mulf %289, %280 : vector<2x32xf32>
    %291 = arith.addf %288, %290 : vector<2x32xf32>
    %292 = math.tanh %291 : vector<2x32xf32>
    %293 = arith.mulf %286, %292 : vector<2x32xf32>
    %294 = arith.truncf %293 : vector<2x32xf32> to vector<2x32xbf16>
    %c0_102 = arith.constant 0 : index
    %295 = arith.index_cast %263 : i32 to index
    %c0_103 = arith.constant 0 : index
    %c0_104 = arith.constant 0 : index
    %296 = vector.load %arg3[%c0_102, %295, %c0_103, %c0_104] : memref<1x8x2x32xbf16, #tpu.memory_space<vmem>>, vector<1x1x2x32xbf16>
    %297 = vector.shape_cast %296 : vector<1x1x2x32xbf16> to vector<2x32xbf16>
    %298 = vector.shape_cast %294 : vector<2x32xbf16> to vector<1x1x2x32xbf16>
    tpu.vector_store %arg3[%c0_102, %295, %c0_103, %c0_104], %298 {strides = array<i32>} : memref<1x8x2x32xbf16, #tpu.memory_space<vmem>>, vector<1x1x2x32xbf16>,
    %c8_i32 = arith.constant 8 : i32
    return
  }
  func.func @transform_0(%arg0: i32) -> (i32, i32, i32, i32) {
    %c0_i32 = arith.constant 0 : i32
    %c0_i32_0 = arith.constant 0 : i32
    %c0_i32_1 = arith.constant 0 : i32
    %c0_i32_2 = arith.constant 0 : i32
    return %arg0, %c0_i32, %c0_i32_0, %c0_i32_1 : i32, i32, i32, i32
  }
  func.func @transform_1(%arg0: i32) -> (i32, i32, i32) {
    %c0_i32 = arith.constant 0 : i32
    %c0_i32_0 = arith.constant 0 : i32
    %c0_i32_1 = arith.constant 0 : i32
    return %arg0, %c0_i32, %c0_i32_0 : i32, i32, i32
  }
  func.func @transform_2(%arg0: i32) -> (i32, i32, i32, i32) {
    %c0_i32 = arith.constant 0 : i32
    %c0_i32_0 = arith.constant 0 : i32
    %c0_i32_1 = arith.constant 0 : i32
    %c0_i32_2 = arith.constant 0 : i32
    return %arg0, %c0_i32, %c0_i32_0, %c0_i32_1 : i32, i32, i32, i32
  }
}

module attributes {stable_mosaic.version = 11 : i64} {
  func.func @_proj_pair_kernel(%arg0: i32, %arg1: i32, %arg2: memref<2x16x32xbf16, #tpu.memory_space<vmem>>, %arg3: memref<1x2x32x128xbf16, #tpu.memory_space<vmem>>, %arg4: memref<1x1x128xf32, #tpu.memory_space<vmem>>, %arg5: memref<1x16x128xbf16, #tpu.memory_space<vmem>>) attributes {dimension_semantics = [#tpu.dimension_semantics<parallel>, #tpu.dimension_semantics<arbitrary>], iteration_bounds = array<i64: 1, 2>, scalar_prefetch = 0 : i64, scratch_operands = 0 : i64, tpu.core_type = #tpu.core_type<tc>, window_params = [{transform_indices = @transform_0, window_bounds = array<i64: 2, 16, 32>}, {transform_indices = @transform_1, window_bounds = array<i64: 1, 2, 32, 128>}, {transform_indices = @transform_2, window_bounds = array<i64: 1, 1, 128>}, {transform_indices = @transform_3, window_bounds = array<i64: 1, 16, 128>}]} {
    %c0 = arith.constant 0 : index
    %c0_0 = arith.constant 0 : index
    %c0_1 = arith.constant 0 : index
    %0 = vector.load %arg2[%c0, %c0_0, %c0_1] : memref<2x16x32xbf16, #tpu.memory_space<vmem>>, vector<1x16x32xbf16>
    %1 = vector.shape_cast %0 : vector<1x16x32xbf16> to vector<16x32xbf16>
    %c0_2 = arith.constant 0 : index
    %c0_3 = arith.constant 0 : index
    %c0_4 = arith.constant 0 : index
    %c0_5 = arith.constant 0 : index
    %2 = vector.load %arg3[%c0_2, %c0_3, %c0_4, %c0_5] : memref<1x2x32x128xbf16, #tpu.memory_space<vmem>>, vector<1x1x32x128xbf16>
    %3 = vector.shape_cast %2 : vector<1x1x32x128xbf16> to vector<32x128xbf16>
    %cst = arith.constant dense<0.000000e+00> : vector<16x128xf32>
    %4 = tpu.matmul %1, %3, %cst {dimension_numbers = #tpu.dot_dimension_numbers<[1], [0], [0], [1], [0, 0, 1, 1], [], []>} : vector<16x32xbf16>, vector<32x128xbf16>, vector<16x128xf32> -> vector<16x128xf32>
    %c1 = arith.constant 1 : index
    %c0_6 = arith.constant 0 : index
    %c0_7 = arith.constant 0 : index
    %5 = vector.load %arg2[%c1, %c0_6, %c0_7] : memref<2x16x32xbf16, #tpu.memory_space<vmem>>, vector<1x16x32xbf16>
    %6 = vector.shape_cast %5 : vector<1x16x32xbf16> to vector<16x32xbf16>
    %c0_8 = arith.constant 0 : index
    %c1_9 = arith.constant 1 : index
    %c0_10 = arith.constant 0 : index
    %c0_11 = arith.constant 0 : index
    %7 = vector.load %arg3[%c0_8, %c1_9, %c0_10, %c0_11] : memref<1x2x32x128xbf16, #tpu.memory_space<vmem>>, vector<1x1x32x128xbf16>
    %8 = vector.shape_cast %7 : vector<1x1x32x128xbf16> to vector<32x128xbf16>
    %cst_12 = arith.constant dense<0.000000e+00> : vector<16x128xf32>
    %9 = tpu.matmul %6, %8, %cst_12 {dimension_numbers = #tpu.dot_dimension_numbers<[1], [0], [0], [1], [0, 0, 1, 1], [], []>} : vector<16x32xbf16>, vector<32x128xbf16>, vector<16x128xf32> -> vector<16x128xf32>
    %10 = arith.addf %4, %9 : vector<16x128xf32>
    %c0_13 = arith.constant 0 : index
    %c0_14 = arith.constant 0 : index
    %c0_15 = arith.constant 0 : index
    %11 = vector.load %arg4[%c0_13, %c0_14, %c0_15] : memref<1x1x128xf32, #tpu.memory_space<vmem>>, vector<1x1x128xf32>
    %12 = vector.shape_cast %11 : vector<1x1x128xf32> to vector<1x128xf32>
    %13 = vector.broadcast %12 : vector<1x128xf32> to vector<16x128xf32>
    %14 = arith.addf %10, %13 : vector<16x128xf32>
    %15 = arith.truncf %14 : vector<16x128xf32> to vector<16x128xbf16>
    %c0_16 = arith.constant 0 : index
    %c0_17 = arith.constant 0 : index
    %c0_18 = arith.constant 0 : index
    %16 = vector.load %arg5[%c0_16, %c0_17, %c0_18] : memref<1x16x128xbf16, #tpu.memory_space<vmem>>, vector<1x16x128xbf16>
    %17 = vector.shape_cast %16 : vector<1x16x128xbf16> to vector<16x128xbf16>
    %18 = vector.shape_cast %15 : vector<16x128xbf16> to vector<1x16x128xbf16>
    tpu.vector_store %arg5[%c0_16, %c0_17, %c0_18], %18 {strides = array<i32>} : memref<1x16x128xbf16, #tpu.memory_space<vmem>>, vector<1x16x128xbf16>,
    return
  }
  func.func @transform_0(%arg0: i32, %arg1: i32) -> (i32, i32, i32) {
    %c0_i32 = arith.constant 0 : i32
    %c0_i32_0 = arith.constant 0 : i32
    %c0_i32_1 = arith.constant 0 : i32
    return %c0_i32, %arg0, %c0_i32_0 : i32, i32, i32
  }
  func.func @transform_1(%arg0: i32, %arg1: i32) -> (i32, i32, i32, i32) {
    %c0_i32 = arith.constant 0 : i32
    %c0_i32_0 = arith.constant 0 : i32
    %c0_i32_1 = arith.constant 0 : i32
    %c0_i32_2 = arith.constant 0 : i32
    return %arg1, %c0_i32, %c0_i32_0, %c0_i32_1 : i32, i32, i32, i32
  }
  func.func @transform_2(%arg0: i32, %arg1: i32) -> (i32, i32, i32) {
    %c0_i32 = arith.constant 0 : i32
    %c0_i32_0 = arith.constant 0 : i32
    %c0_i32_1 = arith.constant 0 : i32
    return %arg1, %c0_i32, %c0_i32_0 : i32, i32, i32
  }
  func.func @transform_3(%arg0: i32, %arg1: i32) -> (i32, i32, i32) {
    %c0_i32 = arith.constant 0 : i32
    %c0_i32_0 = arith.constant 0 : i32
    return %arg1, %arg0, %c0_i32 : i32, i32, i32
  }
}

module attributes {stable_mosaic.version = 11 : i64} {
  func.func @_head_softmax_kernel(%arg0: i32, %arg1: memref<2x16x32xbf16, #tpu.memory_space<vmem>>, %arg2: memref<2x32x32xbf16, #tpu.memory_space<vmem>>, %arg3: memref<1x32xf32, #tpu.memory_space<vmem>>, %arg4: memref<16x32xf32, #tpu.memory_space<vmem>>) attributes {dimension_semantics = [#tpu.dimension_semantics<parallel>], iteration_bounds = array<i64: 1>, scalar_prefetch = 0 : i64, scratch_operands = 0 : i64, tpu.core_type = #tpu.core_type<tc>, window_params = [{transform_indices = @transform_0, window_bounds = array<i64: 2, 16, 32>}, {pipeline_mode = #tpu.pipeline_mode<synchronous>, transform_indices = @transform_1, window_bounds = array<i64: 2, 32, 32>}, {pipeline_mode = #tpu.pipeline_mode<synchronous>, transform_indices = @transform_2, window_bounds = array<i64: 1, 32>}, {transform_indices = @transform_3, window_bounds = array<i64: 16, 32>}]} {
    %c0 = arith.constant 0 : index
    %c0_0 = arith.constant 0 : index
    %c0_1 = arith.constant 0 : index
    %0 = vector.load %arg1[%c0, %c0_0, %c0_1] : memref<2x16x32xbf16, #tpu.memory_space<vmem>>, vector<1x16x32xbf16>
    %1 = vector.shape_cast %0 : vector<1x16x32xbf16> to vector<16x32xbf16>
    %c0_2 = arith.constant 0 : index
    %c0_3 = arith.constant 0 : index
    %c0_4 = arith.constant 0 : index
    %2 = vector.load %arg2[%c0_2, %c0_3, %c0_4] : memref<2x32x32xbf16, #tpu.memory_space<vmem>>, vector<1x32x32xbf16>
    %3 = vector.shape_cast %2 : vector<1x32x32xbf16> to vector<32x32xbf16>
    %cst = arith.constant dense<0.000000e+00> : vector<16x32xf32>
    %4 = tpu.matmul %1, %3, %cst {dimension_numbers = #tpu.dot_dimension_numbers<[1], [0], [0], [1], [0, 0, 1, 1], [], []>} : vector<16x32xbf16>, vector<32x32xbf16>, vector<16x32xf32> -> vector<16x32xf32>
    %c1 = arith.constant 1 : index
    %c0_5 = arith.constant 0 : index
    %c0_6 = arith.constant 0 : index
    %5 = vector.load %arg1[%c1, %c0_5, %c0_6] : memref<2x16x32xbf16, #tpu.memory_space<vmem>>, vector<1x16x32xbf16>
    %6 = vector.shape_cast %5 : vector<1x16x32xbf16> to vector<16x32xbf16>
    %c1_7 = arith.constant 1 : index
    %c0_8 = arith.constant 0 : index
    %c0_9 = arith.constant 0 : index
    %7 = vector.load %arg2[%c1_7, %c0_8, %c0_9] : memref<2x32x32xbf16, #tpu.memory_space<vmem>>, vector<1x32x32xbf16>
    %8 = vector.shape_cast %7 : vector<1x32x32xbf16> to vector<32x32xbf16>
    %cst_10 = arith.constant dense<0.000000e+00> : vector<16x32xf32>
    %9 = tpu.matmul %6, %8, %cst_10 {dimension_numbers = #tpu.dot_dimension_numbers<[1], [0], [0], [1], [0, 0, 1, 1], [], []>} : vector<16x32xbf16>, vector<32x32xbf16>, vector<16x32xf32> -> vector<16x32xf32>
    %10 = arith.addf %4, %9 : vector<16x32xf32>
    %c0_11 = arith.constant 0 : index
    %c0_12 = arith.constant 0 : index
    %11 = vector.load %arg3[%c0_11, %c0_12] : memref<1x32xf32, #tpu.memory_space<vmem>>, vector<1x32xf32>
    %12 = vector.broadcast %11 : vector<1x32xf32> to vector<16x32xf32>
    %13 = arith.addf %10, %12 : vector<16x32xf32>
    %14 = vector.extract_strided_slice %13 {offsets = [0, 0], sizes = [16, 16], strides = [1, 1]} : vector<16x32xf32> to vector<16x16xf32>
    %cst_13 = arith.constant dense<0xFF800000> : vector<16xf32>
    %15 = vector.multi_reduction <maximumf>, %14, %cst_13 [1] : vector<16x16xf32> to vector<16xf32>
    %16 = vector.shape_cast %15 : vector<16xf32> to vector<16x1xf32>
    %17 = vector.broadcast %16 : vector<16x1xf32> to vector<16x16xf32>
    %18 = arith.subf %14, %17 : vector<16x16xf32>
    %19 = math.exp %18 : vector<16x16xf32>
    %cst_14 = arith.constant dense<0.000000e+00> : vector<16xf32>
    %20 = vector.multi_reduction <add>, %19, %cst_14 [1] : vector<16x16xf32> to vector<16xf32>
    %21 = vector.shape_cast %20 : vector<16xf32> to vector<16x1xf32>
    %22 = vector.broadcast %21 : vector<16x1xf32> to vector<16x16xf32>
    %23 = arith.divf %19, %22 : vector<16x16xf32>
    %c0_15 = arith.constant 0 : index
    %c0_16 = arith.constant 0 : index
    %24 = vector.load %arg4[%c0_15, %c0_16] : memref<16x32xf32, #tpu.memory_space<vmem>>, vector<16x16xf32>
    tpu.vector_store %arg4[%c0_15, %c0_16], %23 {strides = array<i32>} : memref<16x32xf32, #tpu.memory_space<vmem>>, vector<16x16xf32>,
    %25 = vector.extract_strided_slice %13 {offsets = [0, 16], sizes = [16, 16], strides = [1, 1]} : vector<16x32xf32> to vector<16x16xf32>
    %cst_17 = arith.constant dense<0xFF800000> : vector<16xf32>
    %26 = vector.multi_reduction <maximumf>, %25, %cst_17 [1] : vector<16x16xf32> to vector<16xf32>
    %27 = vector.shape_cast %26 : vector<16xf32> to vector<16x1xf32>
    %28 = vector.broadcast %27 : vector<16x1xf32> to vector<16x16xf32>
    %29 = arith.subf %25, %28 : vector<16x16xf32>
    %30 = math.exp %29 : vector<16x16xf32>
    %cst_18 = arith.constant dense<0.000000e+00> : vector<16xf32>
    %31 = vector.multi_reduction <add>, %30, %cst_18 [1] : vector<16x16xf32> to vector<16xf32>
    %32 = vector.shape_cast %31 : vector<16xf32> to vector<16x1xf32>
    %33 = vector.broadcast %32 : vector<16x1xf32> to vector<16x16xf32>
    %34 = arith.divf %30, %33 : vector<16x16xf32>
    %c0_19 = arith.constant 0 : index
    %c16 = arith.constant 16 : index
    %35 = vector.load %arg4[%c0_19, %c16] : memref<16x32xf32, #tpu.memory_space<vmem>>, vector<16x16xf32>
    tpu.vector_store %arg4[%c0_19, %c16], %34 {strides = array<i32>} : memref<16x32xf32, #tpu.memory_space<vmem>>, vector<16x16xf32>,
    return
  }
  func.func @transform_0(%arg0: i32) -> (i32, i32, i32) {
    %c0_i32 = arith.constant 0 : i32
    %c0_i32_0 = arith.constant 0 : i32
    %c0_i32_1 = arith.constant 0 : i32
    return %c0_i32, %arg0, %c0_i32_0 : i32, i32, i32
  }
  func.func @transform_1(%arg0: i32) -> (i32, i32, i32) {
    %c0_i32 = arith.constant 0 : i32
    %c0_i32_0 = arith.constant 0 : i32
    %c0_i32_1 = arith.constant 0 : i32
    %c0_i32_2 = arith.constant 0 : i32
    return %c0_i32, %c0_i32_0, %c0_i32_1 : i32, i32, i32
  }
  func.func @transform_2(%arg0: i32) -> (i32, i32) {
    %c0_i32 = arith.constant 0 : i32
    %c0_i32_0 = arith.constant 0 : i32
    %c0_i32_1 = arith.constant 0 : i32
    return %c0_i32, %c0_i32_0 : i32, i32
  }
  func.func @transform_3(%arg0: i32) -> (i32, i32) {
    %c0_i32 = arith.constant 0 : i32
    %c0_i32_0 = arith.constant 0 : i32
    return %arg0, %c0_i32 : i32, i32
  }
}

</mosaic_0001>

<llo_original>
// kernel: separator_forward.9
$region0: #{separator_forward.9}
  #allocation0 [shape = 'u32[]', space=smem, size = 0x4, offset = 0x4, fixed_abs, tag = 'smem constant byte address 0x4 - core index']
  #allocation1 [shape = 'u32[144,128]{1,0:T(1,128)}', space=vmem, size = 0x12000, scoped, tag = 'internal scratch']
  %s0 = inlined_call_operand.vmem [shape: bf16[16,16], index: 0, kind: input, shape index: {}]
  %s1 = inlined_call_operand.vmem [shape: bf16[2,16,128], index: 1, kind: input, shape index: {}]
  %s2 = inlined_call_operand.vmem [shape: f32[2,1,128], index: 2, kind: input, shape index: {}]
  %s3 = inlined_call_operand.vmem [shape: bf16[2,16,128], index: 3, kind: output, shape index: {}]
  %s4 = sld [smem:[#allocation0]]
  $region45: #{separator_forward.9} parent=0
    _
  %s6 = ssub.s32 1, %s4
  %s7 = scalar_select 0, %s6, %s4
  loop: start=0, step=1, limit=4
  $region2: #{separator_forward.9} parent=0 // loop_pre_header
    _
  $region3: #{separator_forward.9} parent=0 // loop_header
    %s9 = sphi 0, %s13
    %p10 = scmp.ge.s32.totalorder %s9, 4
    %s16 = sphi 0, %s28
    %s17 = sphi 0, %s24
    %s18 = sphi 0, %s16
    %s19 = sphi 0, %s17
    %s20 = sphi 0, %s18
    %s21 = sphi 0, %s19
    %s31 = sphi 0, %s33
    %s34 = sphi 0, %s31
    %s35 = sphi 0, %s34
    %s51 = sphi 0, %s35
    %s57 = sphi 0, %s59
    %s60 = sphi 0, %s57
    %s61 = sphi 0, %s60
    %s77 = sphi 0, %s61
    %s83 = sphi 0, %s85
    %s86 = sphi 0, %s83
    %s87 = sphi 0, %s86
    %s103 = sphi 0, %s87
    %s111 = sphi 0, %s113
    %s114 = sphi 0, %s111
    %s115 = sphi 0, %s114
    %s131 = sphi 0, %s115
  $region4: #{separator_forward.9} parent=0 // loop_header_branch
    %12 = sbr.rel (%p10) target = $region8
  $region5: #{separator_forward.9} parent=0 // loop_body
    %s14 = ssub.s32 %s9, 1
    %s15 = ssub.s32 %s9, 2
    %s22 = sadd.s32 1, %s17
    %p23 = scmp.ge.s32.totalorder %s22, 2
    %s24 = scalar_select %p23, 0, %s22
    %s25 = sadd.s32 1, %s16
    %s26 = scalar_select %p23, %s25, %s16
    %p27 = scmp.ge.s32.totalorder %s26, 1
    %s28 = scalar_select %p27, 0, %s26
    %s29 = ssub.s32 %s16, %s28
    %p30 = scmp.eq.s32.totalorder %s29, 0
    %s32 = sadd.s32 %s31, 1
    %s33 = scalar_select %p30, %s31, %s32
    %p36 = pneg %p30
    %p37 = scmp.eq.s32.totalorder %s9, 1
    %p38 = por %p36, %p37
    %p39 = scmp.ne.s32.totalorder %s31, %s34
    %p40 = scmp.eq.s32.totalorder %s9, 0
    %p41 = por %p39, %p40
    %p42 = scmp.ne.s32.totalorder %s31, %s34
    %p43 = scmp.eq.s32.totalorder %s14, 1
    %p44 = por %p42, %p43
    %p45 = scmp.ne.s32.totalorder %s34, %s35
    %p46 = scmp.eq.s32.totalorder %s14, 0
    %p47 = por %p45, %p46
    %p48 = scmp.ne.s32.totalorder %s34, %s35
    %p49 = scmp.eq.s32.totalorder %s15, 1
    %p50 = por %p48, %p49
    %p52 = scmp.ne.s32.totalorder %s35, %s51
    %p53 = scmp.eq.s32.totalorder %s15, 0
    %p54 = por %p52, %p53
    %s55 = ssub.s32 %s17, %s24
    %p56 = scmp.eq.s32.totalorder %s55, 0
    %s58 = sadd.s32 %s57, 1
    %s59 = scalar_select %p56, %s57, %s58
    %p62 = pneg %p56
    %p63 = scmp.eq.s32.totalorder %s9, 1
    %p64 = por %p62, %p63
    %p65 = scmp.ne.s32.totalorder %s57, %s60
    %p66 = scmp.eq.s32.totalorder %s9, 0
    %p67 = por %p65, %p66
    %p68 = scmp.ne.s32.totalorder %s57, %s60
    %p69 = scmp.eq.s32.totalorder %s14, 1
    %p70 = por %p68, %p69
    %p71 = scmp.ne.s32.totalorder %s60, %s61
    %p72 = scmp.eq.s32.totalorder %s14, 0
    %p73 = por %p71, %p72
    %p74 = scmp.ne.s32.totalorder %s60, %s61
    %p75 = scmp.eq.s32.totalorder %s15, 1
    %p76 = por %p74, %p75
    %p78 = scmp.ne.s32.totalorder %s61, %s77
    %p79 = scmp.eq.s32.totalorder %s15, 0
    %p80 = por %p78, %p79
    %s81 = ssub.s32 %s17, %s24
    %p82 = scmp.eq.s32.totalorder %s81, 0
    %s84 = sadd.s32 %s83, 1
    %s85 = scalar_select %p82, %s83, %s84
    %p88 = pneg %p82
    %p89 = scmp.eq.s32.totalorder %s9, 1
    %p90 = por %p88, %p89
    %p91 = scmp.ne.s32.totalorder %s83, %s86
    %p92 = scmp.eq.s32.totalorder %s9, 0
    %p93 = por %p91, %p92
    %p94 = scmp.ne.s32.totalorder %s83, %s86
    %p95 = scmp.eq.s32.totalorder %s14, 1
    %p96 = por %p94, %p95
    %p97 = scmp.ne.s32.totalorder %s86, %s87
    %p98 = scmp.eq.s32.totalorder %s14, 0
    %p99 = por %p97, %p98
    %p100 = scmp.ne.s32.totalorder %s86, %s87
    %p101 = scmp.eq.s32.totalorder %s15, 1
    %p102 = por %p100, %p101
    %p104 = scmp.ne.s32.totalorder %s87, %s103
    %p105 = scmp.eq.s32.totalorder %s15, 0
    %p106 = por %p104, %p105
    %s107 = ssub.s32 %s17, %s24
    %s108 = ssub.s32 %s16, %s28
    %s109 = sor.u32 %s107, %s108
    %p110 = scmp.eq.s32.totalorder %s109, 0
    %s112 = sadd.s32 %s111, 1
    %s113 = scalar_select %p110, %s111, %s112
    %p116 = pneg %p110
    %p117 = scmp.eq.s32.totalorder %s9, 1
    %p118 = por %p116, %p117
    %p119 = scmp.ne.s32.totalorder %s111, %s114
    %p120 = scmp.eq.s32.totalorder %s9, 0
    %p121 = por %p119, %p120
    %p122 = scmp.ne.s32.totalorder %s111, %s114
    %p123 = scmp.eq.s32.totalorder %s14, 1
    %p124 = por %p122, %p123
    %p125 = scmp.ne.s32.totalorder %s114, %s115
    %p126 = scmp.eq.s32.totalorder %s14, 0
    %p127 = por %p125, %p126
    %p128 = scmp.ne.s32.totalorder %s114, %s115
    %p129 = scmp.eq.s32.totalorder %s15, 1
    %p130 = por %p128, %p129
    %p132 = scmp.ne.s32.totalorder %s115, %s131
    %p133 = scmp.eq.s32.totalorder %s15, 0
    %p134 = por %p132, %p133
    %p135 = scmp.le.s32.totalorder 1, %s9
    %p136 = scmp.lt.s32.totalorder %s9, 3
    %p137 = pnand %p135, %p136
    %p138 = pneg %p137
    // Predicated region
    $region9: #{separator_forward.9} parent=5 // pred_check
      _
    $region10: #{separator_forward.9} parent=5 // pred_check_branch
      %140 = sbr.rel (%p137) target = $region12
    $region11: #{separator_forward.9} parent=5 // pred_region
      %s141 = ssub.s32 %s9, 1
      // Predicated region
      $region13: #{separator_forward.9} parent=11 // pred_check
        %p142 = pneg %p47
      $region14: #{separator_forward.9} parent=11 // pred_check_branch
        %144 = sbr.rel (%p142) target = $region16
      $region15: #{separator_forward.9} parent=11 // pred_region
        %s145 = smul.u32 2, %s18
        %p146 = scmp.lt.s32.totalorder %s145, 1
        %s147 = scalar_select %p146, %s145, 1
        %s148 = smul.addr %s147, 4
        %s149 = scalar_lea.vmem %s0, %s148
        %s150 = smul.u32 2, %s18
      $region16: #{separator_forward.9} parent=11 // pred_fallthru
        _
    $region12: #{separator_forward.9} parent=5 // pred_fallthru
      _
    %p151 = scmp.lt.s32.totalorder %s9, 2
    // Predicated region
    $region17: #{separator_forward.9} parent=5 // pred_check
      %p152 = pneg %p151
    $region18: #{separator_forward.9} parent=5 // pred_check_branch
      %154 = sbr.rel (%p152) target = $region20
    $region19: #{separator_forward.9} parent=5 // pred_region
      // Predicated region
      $region21: #{separator_forward.9} parent=19 // pred_check
        %p155 = pneg %p67
      $region22: #{separator_forward.9} parent=19 // pred_check_branch
        %157 = sbr.rel (%p155) target = $region24
      $region23: #{separator_forward.9} parent=19 // pred_region
        %p158 = scmp.lt.s32.totalorder %s17, 1
        %s159 = scalar_select %p158, %s17, 1
        %s160 = smul.addr %s159, 2
        %s161 = smul.addr %s160, 4
        %s162 = scalar_lea.vmem %s1, %s161
      $region24: #{separator_forward.9} parent=19 // pred_fallthru
        _
      // Predicated region
      $region25: #{separator_forward.9} parent=19 // pred_check
        %p163 = pneg %p93
      $region26: #{separator_forward.9} parent=19 // pred_check_branch
        %165 = sbr.rel (%p163) target = $region28
      $region27: #{separator_forward.9} parent=19 // pred_region
        %p166 = scmp.lt.s32.totalorder %s17, 1
        %s167 = scalar_select %p166, %s17, 1
        %s168 = scalar_lea.vmem %s2, %s167
      $region28: #{separator_forward.9} parent=19 // pred_fallthru
        _
    $region20: #{separator_forward.9} parent=5 // pred_fallthru
      _
    %p169 = scmp.le.s32.totalorder 1, %s9
    %p170 = scmp.lt.s32.totalorder %s9, 3
    %p171 = pnand %p169, %p170
    %p172 = pneg %p171
    // Predicated region
    $region29: #{separator_forward.9} parent=5 // pred_check
      _
    $region30: #{separator_forward.9} parent=5 // pred_check_branch
      %174 = sbr.rel (%p171) target = $region32
    $region31: #{separator_forward.9} parent=5 // pred_region
      %s175 = ssub.s32 %s9, 1
      %s176 = smul.u32 2, %s18
      %p177 = scmp.lt.s32.totalorder %s176, 1
      %s178 = scalar_select %p177, %s176, 1
      %s179 = smul.addr %s178, 4
      %s180 = scalar_lea.vmem %s0, %s179
      %p181 = pneg %p47
      %p182 = pneg %p44
      %p183 = scmp.lt.s32.totalorder %s19, 1
      %s184 = scalar_select %p183, %s19, 1
      %s185 = smul.addr %s184, 2
      %s186 = smul.addr %s185, 4
      %s187 = scalar_lea.vmem %s1, %s186
      %p188 = pneg %p73
      %p189 = pneg %p70
      %p190 = scmp.lt.s32.totalorder %s19, 1
      %s191 = scalar_select %p190, %s19, 1
      %s192 = scalar_lea.vmem %s2, %s191
      %p193 = pneg %p99
      %p194 = pneg %p96
      %p195 = pneg %p127
      %p196 = pneg %p124
      %s197 = smul.u32 2, %s18
      %p198 = scmp.lt.s32.totalorder %s19, 1
      %s199 = scalar_select %p198, %s19, 1
      %p200 = scmp.lt.s32.totalorder %s197, 1
      %s201 = scalar_select %p200, %s197, 1
      %s202 = smul.addr %s199, 2
      %s203 = sadd.s32 %s201, %s202
      %s204 = smul.addr %s203, 4
      %s205 = scalar_lea.vmem %s3, %s204
      %s206 = smul.u32 2, %s18
      %p207 = scmp.lt.s32.totalorder %s206, 1
      %s208 = scalar_select %p207, %s206, 1
      %s209 = smul.addr %s208, 4
      %s210 = scalar_lea.vmem %s0, %s209
      %s211 = smul.u32 2, %s18
      %p212 = scmp.lt.s32.totalorder %s19, 1
      %s213 = scalar_select %p212, %s19, 1
      %s214 = smul.addr %s213, 2
      %s215 = smul.addr %s214, 4
      %s216 = scalar_lea.vmem %s1, %s215
      %p217 = scmp.lt.s32.totalorder %s19, 1
      %s218 = scalar_select %p217, %s19, 1
      %s219 = scalar_lea.vmem %s2, %s218
      %s220 = smul.u32 2, %s18
      %p221 = scmp.lt.s32.totalorder %s19, 1
      %s222 = scalar_select %p221, %s19, 1
      %p223 = scmp.lt.s32.totalorder %s220, 1
      %s224 = scalar_select %p223, %s220, 1
      %s225 = smul.addr %s222, 2
      %s226 = sadd.s32 %s224, %s225
      %s227 = smul.addr %s226, 4
      %s228 = scalar_lea.vmem %s3, %s227
      %s229 = smul.u32 2, %s18
      %v231 = vld [vmem:[%s210] sm:$0xf]
      %v232 = vld [vmem:[%s210 + $0x4] sm:$0xf]
      %v233 = vld [vmem:[%s216] sm:$0xf]
      %v234 = vld [vmem:[%s216 + $0x4] sm:$0xf]
      %v235 = vld [vmem:[%s219] sm:$0x1]
      %v237 = vlaneseq
      %v238 = vshrl.u32 %v237, 7
      %v239 = vsub.s32 0, %v238
      %v240 = vrot.slane %v235, %v239
      %v244 = vunpack.c.l.b16 %v231
      %v245 = vunpack.c.l.b16 %v232
      %v246 = vpack.c.b16 %v245, %v244
      %v249 = vunpack.c.l.b16 %v233
      %v250 = vunpack.c.l.b16 %v234
      %v251 = vpack.c.b16 %v250, %v249
      %vm253 = vcmask 130048
      %v255 = vsel %vm253, %v246, 0
      %257 = vmatprep.subr.bf16.mxu0 0
      %258 = vmatpush1.bf16.msra.mxu0 0
      %259 = vmatprep.subr.bf16.mxu0 0
      %260 = vmatpush1.bf16.msra.mxu0 0
      %261 = vmatprep.subr.bf16.mxu0 0
      %262 = vmatpush1.bf16.msra.mxu0 0
      %263 = vmatprep.subr.bf16.mxu0 0
      %264 = vmatpush1.bf16.msra.mxu0 0
      %265 = vmatprep.subr.bf16.mxu0 0
      %266 = vmatpush1.bf16.msra.mxu0 0
      %267 = vmatprep.subr.bf16.mxu0 0
      %268 = vmatpush1.bf16.msra.mxu0 0
      %269 = vmatprep.subr.bf16.mxu0 0
      %270 = vmatpush1.bf16.msra.mxu0 0
      %271 = vmatprep.subr.bf16.mxu0 0
      %272 = vmatpush1.bf16.msra.mxu0 %v251
      %273 = vmatprep.subr.bf16.mxu0 0
      %274 = vmatpush2.bf16.msra.mxu0 0
      %275 = vmatprep.subr.bf16.mxu0 0
      %276 = vmatpush2.bf16.msra.mxu0 0
      %277 = vmatprep.subr.bf16.mxu0 0
      %278 = vmatpush2.bf16.msra.mxu0 0
      %279 = vmatprep.subr.bf16.mxu0 0
      %280 = vmatpush2.bf16.msra.mxu0 0
      %281 = vmatprep.subr.bf16.mxu0 0
      %282 = vmatpush2.bf16.msra.mxu0 0
      %283 = vmatprep.subr.bf16.mxu0 0
      %284 = vmatpush2.bf16.msra.mxu0 0
      %285 = vmatprep.subr.bf16.mxu0 0
      %286 = vmatpush2.bf16.msra.mxu0 0
      %287 = vmatprep.subr.bf16.mxu0 0
      %288 = vmatpush2.bf16.msra.mxu0 0
      %289 = vmatprep.mubr.bf16.mxu0 0
      %290 = vmatmul.mubr.bf16.gmra.mxu0 %v255
      %v291 = vpop.f32.mrf.mxu0
      %v292 = vadd.f32 %v240, %v291
      %v293 = vpop.f32.mrf.mxu0
      %v294 = vpop.f32.mrf.mxu0
      %v295 = vadd.f32 %v240, %v294
      %v296 = vpop.f32.mrf.mxu0
      %297 = vdwg.mxu0
      %v298 = vpack.c.bf16 %v295, %v292
      %v300 = vunpack.c.l.b16 %v298
      %v301 = vunpack.c.h.b16 %v298
      %v302 = vpack.c.b16 %v300, %v300
      %v303 = vpack.c.b16 %v301, %v301
      %306 = vst [vmem:[%s228] sm:$0xf] %v302
      %307 = vst [vmem:[%s228 + $0x4] sm:$0xf] %v303
      %s308 = smul.u32 2, %s18
      %p309 = scmp.lt.s32.totalorder %s19, 1
      %s310 = scalar_select %p309, %s19, 1
      %p311 = scmp.lt.s32.totalorder %s308, 1
      %s312 = scalar_select %p311, %s308, 1
      %s313 = smul.addr %s310, 2
      %s314 = sadd.s32 %s312, %s313
      %s315 = smul.addr %s314, 4
      %s316 = scalar_lea.vmem %s3, %s315
      // Predicated region
      $region33: #{separator_forward.9} parent=31 // pred_check
        %p317 = pneg %p124
      $region34: #{separator_forward.9} parent=31 // pred_check_branch
        %319 = sbr.rel (%p317) target = $region36
      $region35: #{separator_forward.9} parent=31 // pred_region
        %s320 = smul.u32 2, %s18
      $region36: #{separator_forward.9} parent=31 // pred_fallthru
        _
    $region32: #{separator_forward.9} parent=5 // pred_fallthru
      _
    %p321 = scmp.le.s32.totalorder 2, %s9
    // Predicated region
    $region37: #{separator_forward.9} parent=5 // pred_check
      %p322 = pneg %p321
    $region38: #{separator_forward.9} parent=5 // pred_check_branch
      %324 = sbr.rel (%p322) target = $region40
    $region39: #{separator_forward.9} parent=5 // pred_region
      %s325 = ssub.s32 %s9, 2
      // Predicated region
      $region41: #{separator_forward.9} parent=39 // pred_check
        %p326 = pneg %p130
      $region42: #{separator_forward.9} parent=39 // pred_check_branch
        %328 = sbr.rel (%p326) target = $region44
      $region43: #{separator_forward.9} parent=39 // pred_region
        %s329 = smul.u32 2, %s20
        %p330 = scmp.lt.s32.totalorder %s21, 1
        %s331 = scalar_select %p330, %s21, 1
        %p332 = scmp.lt.s32.totalorder %s329, 1
        %s333 = scalar_select %p332, %s329, 1
        %s334 = smul.addr %s331, 2
        %s335 = sadd.s32 %s333, %s334
        %s336 = smul.addr %s335, 4
        %s337 = scalar_lea.vmem %s3, %s336
      $region44: #{separator_forward.9} parent=39 // pred_fallthru
        _
    $region40: #{separator_forward.9} parent=5 // pred_fallthru
      _
  $region6: #{separator_forward.9} parent=0 // loop_footer
    %s13 = sadd.s32 1, %s9
  $region7: #{separator_forward.9} parent=0 // loop_footer_branch
    %8 = sbr.rel target = $region3
  $region8: #{separator_forward.9} parent=0 // loop_exit
    _

// kernel: separator_forward.11
$region0: #{separator_forward.11}
  #allocation0 [shape = 'u32[]', space=smem, size = 0x4, offset = 0x4, fixed_abs, tag = 'smem constant byte address 0x4 - core index']
  #allocation1 [shape = 'u32[144,128]{1,0:T(1,128)}', space=vmem, size = 0x12000, scoped, tag = 'internal scratch']
  %s0 = inlined_call_operand.vmem [shape: bf16[2,16,32], index: 0, kind: input, shape index: {}]
  %s1 = inlined_call_operand.vmem [shape: bf16[2,2,32,128], index: 1, kind: input, shape index: {}]
  %s2 = inlined_call_operand.vmem [shape: f32[2,1,128], index: 2, kind: input, shape index: {}]
  %s3 = inlined_call_operand.vmem [shape: bf16[2,16,128], index: 3, kind: output, shape index: {}]
  %s4 = sld [smem:[#allocation0]]
  $region45: #{separator_forward.11} parent=0
    _
  %s6 = ssub.s32 1, %s4
  %s7 = scalar_select 0, %s6, %s4
  loop: start=0, step=1, limit=4
  $region2: #{separator_forward.11} parent=0 // loop_pre_header
    _
  $region3: #{separator_forward.11} parent=0 // loop_header
    %s9 = sphi 0, %s13
    %p10 = scmp.ge.s32.totalorder %s9, 4
    %s16 = sphi 0, %s28
    %s17 = sphi 0, %s24
    %s18 = sphi 0, %s16
    %s19 = sphi 0, %s17
    %s20 = sphi 0, %s18
    %s21 = sphi 0, %s19
    %s31 = sphi 0, %s33
    %s34 = sphi 0, %s31
    %s35 = sphi 0, %s34
    %s51 = sphi 0, %s35
    %s57 = sphi 0, %s59
    %s60 = sphi 0, %s57
    %s61 = sphi 0, %s60
    %s77 = sphi 0, %s61
    %s83 = sphi 0, %s85
    %s86 = sphi 0, %s83
    %s87 = sphi 0, %s86
    %s103 = sphi 0, %s87
    %s111 = sphi 0, %s113
    %s114 = sphi 0, %s111
    %s115 = sphi 0, %s114
    %s131 = sphi 0, %s115
  $region4: #{separator_forward.11} parent=0 // loop_header_branch
    %12 = sbr.rel (%p10) target = $region8
  $region5: #{separator_forward.11} parent=0 // loop_body
    %s14 = ssub.s32 %s9, 1
    %s15 = ssub.s32 %s9, 2
    %s22 = sadd.s32 1, %s17
    %p23 = scmp.ge.s32.totalorder %s22, 2
    %s24 = scalar_select %p23, 0, %s22
    %s25 = sadd.s32 1, %s16
    %s26 = scalar_select %p23, %s25, %s16
    %p27 = scmp.ge.s32.totalorder %s26, 1
    %s28 = scalar_select %p27, 0, %s26
    %s29 = ssub.s32 %s16, %s28
    %p30 = scmp.eq.s32.totalorder %s29, 0
    %s32 = sadd.s32 %s31, 1
    %s33 = scalar_select %p30, %s31, %s32
    %p36 = pneg %p30
    %p37 = scmp.eq.s32.totalorder %s9, 1
    %p38 = por %p36, %p37
    %p39 = scmp.ne.s32.totalorder %s31, %s34
    %p40 = scmp.eq.s32.totalorder %s9, 0
    %p41 = por %p39, %p40
    %p42 = scmp.ne.s32.totalorder %s31, %s34
    %p43 = scmp.eq.s32.totalorder %s14, 1
    %p44 = por %p42, %p43
    %p45 = scmp.ne.s32.totalorder %s34, %s35
    %p46 = scmp.eq.s32.totalorder %s14, 0
    %p47 = por %p45, %p46
    %p48 = scmp.ne.s32.totalorder %s34, %s35
    %p49 = scmp.eq.s32.totalorder %s15, 1
    %p50 = por %p48, %p49
    %p52 = scmp.ne.s32.totalorder %s35, %s51
    %p53 = scmp.eq.s32.totalorder %s15, 0
    %p54 = por %p52, %p53
    %s55 = ssub.s32 %s17, %s24
    %p56 = scmp.eq.s32.totalorder %s55, 0
    %s58 = sadd.s32 %s57, 1
    %s59 = scalar_select %p56, %s57, %s58
    %p62 = pneg %p56
    %p63 = scmp.eq.s32.totalorder %s9, 1
    %p64 = por %p62, %p63
    %p65 = scmp.ne.s32.totalorder %s57, %s60
    %p66 = scmp.eq.s32.totalorder %s9, 0
    %p67 = por %p65, %p66
    %p68 = scmp.ne.s32.totalorder %s57, %s60
    %p69 = scmp.eq.s32.totalorder %s14, 1
    %p70 = por %p68, %p69
    %p71 = scmp.ne.s32.totalorder %s60, %s61
    %p72 = scmp.eq.s32.totalorder %s14, 0
    %p73 = por %p71, %p72
    %p74 = scmp.ne.s32.totalorder %s60, %s61
    %p75 = scmp.eq.s32.totalorder %s15, 1
    %p76 = por %p74, %p75
    %p78 = scmp.ne.s32.totalorder %s61, %s77
    %p79 = scmp.eq.s32.totalorder %s15, 0
    %p80 = por %p78, %p79
    %s81 = ssub.s32 %s17, %s24
    %p82 = scmp.eq.s32.totalorder %s81, 0
    %s84 = sadd.s32 %s83, 1
    %s85 = scalar_select %p82, %s83, %s84
    %p88 = pneg %p82
    %p89 = scmp.eq.s32.totalorder %s9, 1
    %p90 = por %p88, %p89
    %p91 = scmp.ne.s32.totalorder %s83, %s86
    %p92 = scmp.eq.s32.totalorder %s9, 0
    %p93 = por %p91, %p92
    %p94 = scmp.ne.s32.totalorder %s83, %s86
    %p95 = scmp.eq.s32.totalorder %s14, 1
    %p96 = por %p94, %p95
    %p97 = scmp.ne.s32.totalorder %s86, %s87
    %p98 = scmp.eq.s32.totalorder %s14, 0
    %p99 = por %p97, %p98
    %p100 = scmp.ne.s32.totalorder %s86, %s87
    %p101 = scmp.eq.s32.totalorder %s15, 1
    %p102 = por %p100, %p101
    %p104 = scmp.ne.s32.totalorder %s87, %s103
    %p105 = scmp.eq.s32.totalorder %s15, 0
    %p106 = por %p104, %p105
    %s107 = ssub.s32 %s17, %s24
    %s108 = ssub.s32 %s16, %s28
    %s109 = sor.u32 %s107, %s108
    %p110 = scmp.eq.s32.totalorder %s109, 0
    %s112 = sadd.s32 %s111, 1
    %s113 = scalar_select %p110, %s111, %s112
    %p116 = pneg %p110
    %p117 = scmp.eq.s32.totalorder %s9, 1
    %p118 = por %p116, %p117
    %p119 = scmp.ne.s32.totalorder %s111, %s114
    %p120 = scmp.eq.s32.totalorder %s9, 0
    %p121 = por %p119, %p120
    %p122 = scmp.ne.s32.totalorder %s111, %s114
    %p123 = scmp.eq.s32.totalorder %s14, 1
    %p124 = por %p122, %p123
    %p125 = scmp.ne.s32.totalorder %s114, %s115
    %p126 = scmp.eq.s32.totalorder %s14, 0
    %p127 = por %p125, %p126
    %p128 = scmp.ne.s32.totalorder %s114, %s115
    %p129 = scmp.eq.s32.totalorder %s15, 1
    %p130 = por %p128, %p129
    %p132 = scmp.ne.s32.totalorder %s115, %s131
    %p133 = scmp.eq.s32.totalorder %s15, 0
    %p134 = por %p132, %p133
    %p135 = scmp.le.s32.totalorder 1, %s9
    %p136 = scmp.lt.s32.totalorder %s9, 3
    %p137 = pnand %p135, %p136
    %p138 = pneg %p137
    // Predicated region
    $region9: #{separator_forward.11} parent=5 // pred_check
      _
    $region10: #{separator_forward.11} parent=5 // pred_check_branch
      %140 = sbr.rel (%p137) target = $region12
    $region11: #{separator_forward.11} parent=5 // pred_region
      %s141 = ssub.s32 %s9, 1
      // Predicated region
      $region13: #{separator_forward.11} parent=11 // pred_check
        %p142 = pneg %p47
      $region14: #{separator_forward.11} parent=11 // pred_check_branch
        %144 = sbr.rel (%p142) target = $region16
      $region15: #{separator_forward.11} parent=11 // pred_region
        %s145 = smul.u32 2, %s18
        %p146 = scmp.lt.s32.totalorder %s145, 1
        %s147 = scalar_select %p146, %s145, 1
        %s148 = smul.addr %s147, 4
        %s149 = scalar_lea.vmem %s0, %s148
        %s150 = smul.u32 2, %s18
      $region16: #{separator_forward.11} parent=11 // pred_fallthru
        _
    $region12: #{separator_forward.11} parent=5 // pred_fallthru
      _
    %p151 = scmp.lt.s32.totalorder %s9, 2
    // Predicated region
    $region17: #{separator_forward.11} parent=5 // pred_check
      %p152 = pneg %p151
    $region18: #{separator_forward.11} parent=5 // pred_check_branch
      %154 = sbr.rel (%p152) target = $region20
    $region19: #{separator_forward.11} parent=5 // pred_region
      // Predicated region
      $region21: #{separator_forward.11} parent=19 // pred_check
        %p155 = pneg %p67
      $region22: #{separator_forward.11} parent=19 // pred_check_branch
        %157 = sbr.rel (%p155) target = $region24
      $region23: #{separator_forward.11} parent=19 // pred_region
        %p158 = scmp.lt.s32.totalorder %s17, 1
        %s159 = scalar_select %p158, %s17, 1
        %s160 = smul.addr %s159, 8
        %s161 = smul.addr %s160, 4
        %s162 = scalar_lea.vmem %s1, %s161
      $region24: #{separator_forward.11} parent=19 // pred_fallthru
        _
      // Predicated region
      $region25: #{separator_forward.11} parent=19 // pred_check
        %p163 = pneg %p93
      $region26: #{separator_forward.11} parent=19 // pred_check_branch
        %165 = sbr.rel (%p163) target = $region28
      $region27: #{separator_forward.11} parent=19 // pred_region
        %p166 = scmp.lt.s32.totalorder %s17, 1
        %s167 = scalar_select %p166, %s17, 1
        %s168 = scalar_lea.vmem %s2, %s167
      $region28: #{separator_forward.11} parent=19 // pred_fallthru
        _
    $region20: #{separator_forward.11} parent=5 // pred_fallthru
      _
    %p169 = scmp.le.s32.totalorder 1, %s9
    %p170 = scmp.lt.s32.totalorder %s9, 3
    %p171 = pnand %p169, %p170
    %p172 = pneg %p171
    // Predicated region
    $region29: #{separator_forward.11} parent=5 // pred_check
      _
    $region30: #{separator_forward.11} parent=5 // pred_check_branch
      %174 = sbr.rel (%p171) target = $region32
    $region31: #{separator_forward.11} parent=5 // pred_region
      %s175 = ssub.s32 %s9, 1
      %s176 = smul.u32 2, %s18
      %p177 = scmp.lt.s32.totalorder %s176, 1
      %s178 = scalar_select %p177, %s176, 1
      %s179 = smul.addr %s178, 4
      %s180 = scalar_lea.vmem %s0, %s179
      %p181 = pneg %p47
      %p182 = pneg %p44
      %p183 = scmp.lt.s32.totalorder %s19, 1
      %s184 = scalar_select %p183, %s19, 1
      %s185 = smul.addr %s184, 8
      %s186 = smul.addr %s185, 4
      %s187 = scalar_lea.vmem %s1, %s186
      %p188 = pneg %p73
      %p189 = pneg %p70
      %p190 = scmp.lt.s32.totalorder %s19, 1
      %s191 = scalar_select %p190, %s19, 1
      %s192 = scalar_lea.vmem %s2, %s191
      %p193 = pneg %p99
      %p194 = pneg %p96
      %p195 = pneg %p127
      %p196 = pneg %p124
      %s197 = smul.u32 2, %s18
      %p198 = scmp.lt.s32.totalorder %s19, 1
      %s199 = scalar_select %p198, %s19, 1
      %p200 = scmp.lt.s32.totalorder %s197, 1
      %s201 = scalar_select %p200, %s197, 1
      %s202 = smul.addr %s199, 2
      %s203 = sadd.s32 %s201, %s202
      %s204 = smul.addr %s203, 4
      %s205 = scalar_lea.vmem %s3, %s204
      %s206 = smul.u32 2, %s18
      %p207 = scmp.lt.s32.totalorder %s206, 1
      %s208 = scalar_select %p207, %s206, 1
      %s209 = smul.addr %s208, 4
      %s210 = scalar_lea.vmem %s0, %s209
      %s211 = smul.u32 2, %s18
      %p212 = scmp.lt.s32.totalorder %s19, 1
      %s213 = scalar_select %p212, %s19, 1
      %s214 = smul.addr %s213, 8
      %s215 = smul.addr %s214, 4
      %s216 = scalar_lea.vmem %s1, %s215
      %p217 = scmp.lt.s32.totalorder %s19, 1
      %s218 = scalar_select %p217, %s19, 1
      %s219 = scalar_lea.vmem %s2, %s218
      %s220 = smul.u32 2, %s18
      %p221 = scmp.lt.s32.totalorder %s19, 1
      %s222 = scalar_select %p221, %s19, 1
      %p223 = scmp.lt.s32.totalorder %s220, 1
      %s224 = scalar_select %p223, %s220, 1
      %s225 = smul.addr %s222, 2
      %s226 = sadd.s32 %s224, %s225
      %s227 = smul.addr %s226, 4
      %s228 = scalar_lea.vmem %s3, %s227
      %s229 = smul.u32 2, %s18
      %v231 = vld [vmem:[%s210] sm:$0xf]
      %v232 = vld [vmem:[%s210 + $0x4] sm:$0xf]
      %v233 = vld [vmem:[%s216] sm:$0xf]
      %v234 = vld [vmem:[%s216 + $0x4] sm:$0xf]
      %v235 = vld [vmem:[%s216 + $0x8] sm:$0xf]
      %v236 = vld [vmem:[%s216 + $0xc] sm:$0xf]
      %s237 = scalar_lea.vmem %s210, 8
      %v238 = vld [vmem:[%s237] sm:$0xf]
      %v239 = vld [vmem:[%s237 + $0x4] sm:$0xf]
      %s240 = scalar_lea.vmem %s216, 16
      %v241 = vld [vmem:[%s240] sm:$0xf]
      %v242 = vld [vmem:[%s240 + $0x4] sm:$0xf]
      %v243 = vld [vmem:[%s240 + $0x8] sm:$0xf]
      %v244 = vld [vmem:[%s240 + $0xc] sm:$0xf]
      %v247 = vunpack.c.l.b16 %v238
      %v248 = vunpack.c.l.b16 %v239
      %v249 = vpack.c.b16 %v248, %v247
      %v254 = vunpack.c.l.b16 %v241
      %v255 = vunpack.c.l.b16 %v242
      %v256 = vunpack.c.l.b16 %v243
      %v257 = vunpack.c.l.b16 %v244
      %v258 = vpack.c.b16 %v255, %v254
      %v259 = vpack.c.b16 %v257, %v256
      %vm262 = vcmask 261120
      %v264 = vsel %vm262, %v249, 0
      %266 = vmatprep.subr.bf16.mxu0 0
      %267 = vmatpush1.bf16.msra.mxu0 0
      %268 = vmatprep.subr.bf16.mxu0 0
      %269 = vmatpush1.bf16.msra.mxu0 0
      %270 = vmatprep.subr.bf16.mxu0 0
      %271 = vmatpush1.bf16.msra.mxu0 0
      %272 = vmatprep.subr.bf16.mxu0 0
      %273 = vmatpush1.bf16.msra.mxu0 0
      %274 = vmatprep.subr.bf16.mxu0 0
      %275 = vmatpush1.bf16.msra.mxu0 0
      %276 = vmatprep.subr.bf16.mxu0 0
      %277 = vmatpush1.bf16.msra.mxu0 0
      %278 = vmatprep.subr.bf16.mxu0 0
      %279 = vmatpush1.bf16.msra.mxu0 %v259
      %280 = vmatprep.subr.bf16.mxu0 0
      %281 = vmatpush1.bf16.msra.mxu0 %v258
      %282 = vmatprep.subr.bf16.mxu0 0
      %283 = vmatpush2.bf16.msra.mxu0 0
      %284 = vmatprep.subr.bf16.mxu0 0
      %285 = vmatpush2.bf16.msra.mxu0 0
      %286 = vmatprep.subr.bf16.mxu0 0
      %287 = vmatpush2.bf16.msra.mxu0 0
      %288 = vmatprep.subr.bf16.mxu0 0
      %289 = vmatpush2.bf16.msra.mxu0 0
      %290 = vmatprep.subr.bf16.mxu0 0
      %291 = vmatpush2.bf16.msra.mxu0 0
      %292 = vmatprep.subr.bf16.mxu0 0
      %293 = vmatpush2.bf16.msra.mxu0 0
      %294 = vmatprep.subr.bf16.mxu0 0
      %295 = vmatpush2.bf16.msra.mxu0 0
      %296 = vmatprep.subr.bf16.mxu0 0
      %297 = vmatpush2.bf16.msra.mxu0 0
      %298 = vmatprep.mubr.bf16.mxu0 0
      %299 = vmatmul.mubr.bf16.gmra.mxu0 %v264
      %v300 = vpop.f32.mrf.mxu0
      %v301 = vadd.f32 0.0, %v300
      %v302 = vpop.f32.mrf.mxu0
      %v303 = vpop.f32.mrf.mxu0
      %v304 = vadd.f32 0.0, %v303
      %v305 = vpop.f32.mrf.mxu0
      %306 = vdwg.mxu0
      %v309 = vunpack.c.l.b16 %v231
      %v310 = vunpack.c.l.b16 %v232
      %v311 = vpack.c.b16 %v310, %v309
      %v316 = vunpack.c.l.b16 %v233
      %v317 = vunpack.c.l.b16 %v234
      %v318 = vunpack.c.l.b16 %v235
      %v319 = vunpack.c.l.b16 %v236
      %v320 = vpack.c.b16 %v317, %v316
      %v321 = vpack.c.b16 %v319, %v318
      %v325 = vsel %vm262, %v311, 0
      %327 = vmatprep.subr.bf16.mxu0 0
      %328 = vmatpush1.bf16.msra.mxu0 0
      %329 = vmatprep.subr.bf16.mxu0 0
      %330 = vmatpush1.bf16.msra.mxu0 0
      %331 = vmatprep.subr.bf16.mxu0 0
      %332 = vmatpush1.bf16.msra.mxu0 0
      %333 = vmatprep.subr.bf16.mxu0 0
      %334 = vmatpush1.bf16.msra.mxu0 0
      %335 = vmatprep.subr.bf16.mxu0 0
      %336 = vmatpush1.bf16.msra.mxu0 0
      %337 = vmatprep.subr.bf16.mxu0 0
      %338 = vmatpush1.bf16.msra.mxu0 0
      %339 = vmatprep.subr.bf16.mxu0 0
      %340 = vmatpush1.bf16.msra.mxu0 %v321
      %341 = vmatprep.subr.bf16.mxu0 0
      %342 = vmatpush1.bf16.msra.mxu0 %v320
      %343 = vmatprep.subr.bf16.mxu0 0
      %344 = vmatpush2.bf16.msra.mxu0 0
      %345 = vmatprep.subr.bf16.mxu0 0
      %346 = vmatpush2.bf16.msra.mxu0 0
      %347 = vmatprep.subr.bf16.mxu0 0
      %348 = vmatpush2.bf16.msra.mxu0 0
      %349 = vmatprep.subr.bf16.mxu0 0
      %350 = vmatpush2.bf16.msra.mxu0 0
      %351 = vmatprep.subr.bf16.mxu0 0
      %352 = vmatpush2.bf16.msra.mxu0 0
      %353 = vmatprep.subr.bf16.mxu0 0
      %354 = vmatpush2.bf16.msra.mxu0 0
      %355 = vmatprep.subr.bf16.mxu0 0
      %356 = vmatpush2.bf16.msra.mxu0 0
      %357 = vmatprep.subr.bf16.mxu0 0
      %358 = vmatpush2.bf16.msra.mxu0 0
      %359 = vmatprep.mubr.bf16.mxu0 0
      %360 = vmatmul.mubr.bf16.gmra.mxu0 %v325
      %v361 = vpop.f32.mrf.mxu0
      %v362 = vadd.f32 %v301, %v361
      %v363 = vpop.f32.mrf.mxu0
      %v364 = vpop.f32.mrf.mxu0
      %v365 = vadd.f32 %v304, %v364
      %v366 = vpop.f32.mrf.mxu0
      %367 = vdwg.mxu0
      %v368 = vld [vmem:[%s219] sm:$0x1]
      %v370 = vlaneseq
      %v371 = vshrl.u32 %v370, 7
      %v372 = vsub.s32 0, %v371
      %v373 = vrot.slane %v368, %v372
      %v375 = vadd.f32 %v362, %v373
      %v376 = vadd.f32 %v365, %v373
      %v377 = vpack.c.bf16 %v376, %v375
      %v379 = vunpack.c.l.b16 %v377
      %v380 = vunpack.c.h.b16 %v377
      %v381 = vpack.c.b16 %v379, %v379
      %v382 = vpack.c.b16 %v380, %v380
      %385 = vst [vmem:[%s228] sm:$0xf] %v381
      %386 = vst [vmem:[%s228 + $0x4] sm:$0xf] %v382
      %s387 = smul.u32 2, %s18
      %p388 = scmp.lt.s32.totalorder %s19, 1
      %s389 = scalar_select %p388, %s19, 1
      %p390 = scmp.lt.s32.totalorder %s387, 1
      %s391 = scalar_select %p390, %s387, 1
      %s392 = smul.addr %s389, 2
      %s393 = sadd.s32 %s391, %s392
      %s394 = smul.addr %s393, 4
      %s395 = scalar_lea.vmem %s3, %s394
      // Predicated region
      $region33: #{separator_forward.11} parent=31 // pred_check
        %p396 = pneg %p124
      $region34: #{separator_forward.11} parent=31 // pred_check_branch
        %398 = sbr.rel (%p396) target = $region36
      $region35: #{separator_forward.11} parent=31 // pred_region
        %s399 = smul.u32 2, %s18
      $region36: #{separator_forward.11} parent=31 // pred_fallthru
        _
    $region32: #{separator_forward.11} parent=5 // pred_fallthru
      _
    %p400 = scmp.le.s32.totalorder 2, %s9
    // Predicated region
    $region37: #{separator_forward.11} parent=5 // pred_check
      %p401 = pneg %p400
    $region38: #{separator_forward.11} parent=5 // pred_check_branch
      %403 = sbr.rel (%p401) target = $region40
    $region39: #{separator_forward.11} parent=5 // pred_region
      %s404 = ssub.s32 %s9, 2
      // Predicated region
      $region41: #{separator_forward.11} parent=39 // pred_check
        %p405 = pneg %p130
      $region42: #{separator_forward.11} parent=39 // pred_check_branch
        %407 = sbr.rel (%p405) target = $region44
      $region43: #{separator_forward.11} parent=39 // pred_region
        %s408 = smul.u32 2, %s20
        %p409 = scmp.lt.s32.totalorder %s21, 1
        %s410 = scalar_select %p409, %s21, 1
        %p411 = scmp.lt.s32.totalorder %s408, 1
        %s412 = scalar_select %p411, %s408, 1
        %s413 = smul.addr %s410, 2
        %s414 = sadd.s32 %s412, %s413
        %s415 = smul.addr %s414, 4
        %s416 = scalar_lea.vmem %s3, %s415
      $region44: #{separator_forward.11} parent=39 // pred_fallthru
        _
    $region40: #{separator_forward.11} parent=5 // pred_fallthru
      _
  $region6: #{separator_forward.11} parent=0 // loop_footer
    %s13 = sadd.s32 1, %s9
  $region7: #{separator_forward.11} parent=0 // loop_footer_branch
    %8 = sbr.rel target = $region3
  $region8: #{separator_forward.11} parent=0 // loop_exit
    _

// kernel: separator_forward.17
$region0: #{separator_forward.17}
  #allocation0 [shape = 'u32[]', space=smem, size = 0x4, offset = 0x4, fixed_abs, tag = 'smem constant byte address 0x4 - core index']
  #allocation1 [shape = 'u32[144,128]{1,0:T(1,128)}', space=vmem, size = 0x12000, scoped, tag = 'internal scratch']
  %s0 = inlined_call_operand.vmem [shape: bf16[2,16,32], index: 0, kind: input, shape index: {}]
  %s1 = inlined_call_operand.vmem [shape: bf16[2,32,32], index: 1, kind: input, shape index: {}]
  %s2 = inlined_call_operand.vmem [shape: f32[1,32], index: 2, kind: input, shape index: {}]
  %s3 = inlined_call_operand.vmem [shape: f32[16,32], index: 3, kind: output, shape index: {}]
  %s4 = sld [smem:[#allocation0]]
  $region22: #{separator_forward.17} parent=0
    _
  %s6 = ssub.s32 1, %s4
  %s7 = scalar_select 0, %s6, %s4
  // Predicated region
  $region2: #{separator_forward.17} parent=0 // pred_check
    _
  $region3: #{separator_forward.17} parent=0 // pred_check_branch
    %9 = sbr.rel (0) target = $region5
  $region4: #{separator_forward.17} parent=0 // pred_region
    _
  $region5: #{separator_forward.17} parent=0 // pred_fallthru
    _
  // Predicated region
  $region6: #{separator_forward.17} parent=0 // pred_check
    _
  $region7: #{separator_forward.17} parent=0 // pred_check_branch
    %11 = sbr.rel (0) target = $region9
  $region8: #{separator_forward.17} parent=0 // pred_region
    _
  $region9: #{separator_forward.17} parent=0 // pred_fallthru
    _
  // Predicated region
  $region10: #{separator_forward.17} parent=0 // pred_check
    _
  $region11: #{separator_forward.17} parent=0 // pred_check_branch
    %13 = sbr.rel (0) target = $region13
  $region12: #{separator_forward.17} parent=0 // pred_region
    _
  $region13: #{separator_forward.17} parent=0 // pred_fallthru
    _
  %v15 = vld [vmem:[%s0] sm:$0xf]
  %v16 = vld [vmem:[%s0 + $0x4] sm:$0xf]
  %v17 = vld [vmem:[%s1] sm:$0xf]
  %v18 = vld [vmem:[%s1 + $0x4] sm:$0xf]
  %v19 = vld [vmem:[%s1 + $0x8] sm:$0xf]
  %v20 = vld [vmem:[%s1 + $0xc] sm:$0xf]
  %s21 = scalar_lea.vmem %s0, 8
  %v22 = vld [vmem:[%s21] sm:$0xf]
  %v23 = vld [vmem:[%s21 + $0x4] sm:$0xf]
  %s24 = scalar_lea.vmem %s1, 16
  %v25 = vld [vmem:[%s24] sm:$0xf]
  %v26 = vld [vmem:[%s24 + $0x4] sm:$0xf]
  %v27 = vld [vmem:[%s24 + $0x8] sm:$0xf]
  %v28 = vld [vmem:[%s24 + $0xc] sm:$0xf]
  %v31 = vunpack.c.l.b16 %v22
  %v32 = vunpack.c.l.b16 %v23
  %v33 = vpack.c.b16 %v32, %v31
  %v38 = vunpack.c.l.b16 %v25
  %v39 = vunpack.c.l.b16 %v26
  %v40 = vunpack.c.l.b16 %v27
  %v41 = vunpack.c.l.b16 %v28
  %v42 = vpack.c.b16 %v39, %v38
  %v43 = vpack.c.b16 %v41, %v40
  %vm46 = vcmask 261120
  %v48 = vsel %vm46, %v33, 0
  %50 = vmatprep.subr.bf16.mxu0 0
  %51 = vmatpush1.bf16.msra.mxu0 0
  %52 = vmatprep.subr.bf16.mxu0 0
  %53 = vmatpush1.bf16.msra.mxu0 0
  %54 = vmatprep.subr.bf16.mxu0 0
  %55 = vmatpush1.bf16.msra.mxu0 0
  %56 = vmatprep.subr.bf16.mxu0 0
  %57 = vmatpush1.bf16.msra.mxu0 0
  %58 = vmatprep.subr.bf16.mxu0 0
  %59 = vmatpush1.bf16.msra.mxu0 0
  %60 = vmatprep.subr.bf16.mxu0 0
  %61 = vmatpush1.bf16.msra.mxu0 0
  %62 = vmatprep.subr.bf16.mxu0 0
  %63 = vmatpush1.bf16.msra.mxu0 %v43
  %64 = vmatprep.subr.bf16.mxu0 0
  %65 = vmatpush1.bf16.msra.mxu0 %v42
  %66 = vmatprep.subr.bf16.mxu0 0
  %67 = vmatpush2.bf16.msra.mxu0 0
  %68 = vmatprep.subr.bf16.mxu0 0
  %69 = vmatpush2.bf16.msra.mxu0 0
  %70 = vmatprep.subr.bf16.mxu0 0
  %71 = vmatpush2.bf16.msra.mxu0 0
  %72 = vmatprep.subr.bf16.mxu0 0
  %73 = vmatpush2.bf16.msra.mxu0 0
  %74 = vmatprep.subr.bf16.mxu0 0
  %75 = vmatpush2.bf16.msra.mxu0 0
  %76 = vmatprep.subr.bf16.mxu0 0
  %77 = vmatpush2.bf16.msra.mxu0 0
  %78 = vmatprep.subr.bf16.mxu0 0
  %79 = vmatpush2.bf16.msra.mxu0 0
  %80 = vmatprep.subr.bf16.mxu0 0
  %81 = vmatpush2.bf16.msra.mxu0 0
  %82 = vmatprep.mubr.bf16.mxu0 0
  %83 = vmatmul.mubr.bf16.gmra.mxu0 %v48
  %v84 = vpop.f32.mrf.mxu0
  %v85 = vadd.f32 0.0, %v84
  %v86 = vpop.f32.mrf.mxu0
  %v87 = vpop.f32.mrf.mxu0
  %v88 = vadd.f32 0.0, %v87
  %v89 = vpop.f32.mrf.mxu0
  %90 = vdwg.mxu0
  %v93 = vunpack.c.l.b16 %v15
  %v94 = vunpack.c.l.b16 %v16
  %v95 = vpack.c.b16 %v94, %v93
  %v100 = vunpack.c.l.b16 %v17
  %v101 = vunpack.c.l.b16 %v18
  %v102 = vunpack.c.l.b16 %v19
  %v103 = vunpack.c.l.b16 %v20
  %v104 = vpack.c.b16 %v101, %v100
  %v105 = vpack.c.b16 %v103, %v102
  %v109 = vsel %vm46, %v95, 0
  %111 = vmatprep.subr.bf16.mxu0 0
  %112 = vmatpush1.bf16.msra.mxu0 0
  %113 = vmatprep.subr.bf16.mxu0 0
  %114 = vmatpush1.bf16.msra.mxu0 0
  %115 = vmatprep.subr.bf16.mxu0 0
  %116 = vmatpush1.bf16.msra.mxu0 0
  %117 = vmatprep.subr.bf16.mxu0 0
  %118 = vmatpush1.bf16.msra.mxu0 0
  %119 = vmatprep.subr.bf16.mxu0 0
  %120 = vmatpush1.bf16.msra.mxu0 0
  %121 = vmatprep.subr.bf16.mxu0 0
  %122 = vmatpush1.bf16.msra.mxu0 0
  %123 = vmatprep.subr.bf16.mxu0 0
  %124 = vmatpush1.bf16.msra.mxu0 %v105
  %125 = vmatprep.subr.bf16.mxu0 0
  %126 = vmatpush1.bf16.msra.mxu0 %v104
  %127 = vmatprep.subr.bf16.mxu0 0
  %128 = vmatpush2.bf16.msra.mxu0 0
  %129 = vmatprep.subr.bf16.mxu0 0
  %130 = vmatpush2.bf16.msra.mxu0 0
  %131 = vmatprep.subr.bf16.mxu0 0
  %132 = vmatpush2.bf16.msra.mxu0 0
  %133 = vmatprep.subr.bf16.mxu0 0
  %134 = vmatpush2.bf16.msra.mxu0 0
  %135 = vmatprep.subr.bf16.mxu0 0
  %136 = vmatpush2.bf16.msra.mxu0 0
  %137 = vmatprep.subr.bf16.mxu0 0
  %138 = vmatpush2.bf16.msra.mxu0 0
  %139 = vmatprep.subr.bf16.mxu0 0
  %140 = vmatpush2.bf16.msra.mxu0 0
  %141 = vmatprep.subr.bf16.mxu0 0
  %142 = vmatpush2.bf16.msra.mxu0 0
  %143 = vmatprep.mubr.bf16.mxu0 0
  %144 = vmatmul.mubr.bf16.gmra.mxu0 %v109
  %v145 = vpop.f32.mrf.mxu0
  %v146 = vadd.f32 %v85, %v145
  %v147 = vpop.f32.mrf.mxu0
  %v148 = vpop.f32.mrf.mxu0
  %v149 = vadd.f32 %v88, %v148
  %v150 = vpop.f32.mrf.mxu0
  %151 = vdwg.mxu0
  %v152 = vld [vmem:[%s2] sm:$0x1]
  %v154 = vlaneseq
  %v155 = vshrl.u32 %v154, 7
  %v156 = vsub.s32 0, %v155
  %v157 = vrot.slane %v152, %v156
  %v159 = vadd.f32 %v146, %v157
  %v160 = vadd.f32 %v149, %v157
  %vm161 = vcmask 130048
  %v162 = vsel %vm161, %v159, -inf
  %163 = vmax.xlane.f32.xlu0 %v162
  %v164 = vpop.xlane.xlu0 %163
  %v165 = vsel %vm161, %v160, -inf
  %166 = vmax.xlane.f32.xlu0 %v165
  %v167 = vpop.xlane.xlu0 %166
  %v168 = vsub.f32 %v159, %v164
  %v169 = vsub.f32 %v160, %v167
  %v170 = vmul.f32 %v168, 1.442695
  %v171 = vpow.pop %v170
  %v172 = vmul.f32 %v169, 1.442695
  %v173 = vpow.pop %v172
  %v174 = vsel %vm161, %v171, 0.0
  %175 = vadd.xlane.f32.xlu0 %v174
  %v176 = vpop.xlane.xlu0 %175
  %v177 = vsel %vm161, %v173, 0.0
  %178 = vadd.xlane.f32.xlu0 %v177
  %v179 = vpop.xlane.xlu0 %178
  %v180 = vrcp.pop %v176
  %v181 = vmul.f32 %v171, %v180
  %v182 = vrcp.pop %v179
  %v183 = vmul.f32 %v173, %v182
  %184 = vst.msk [vmem:[%s3] sm:$0xff] %vm161, %v181
  %185 = vst.msk [vmem:[%s3 + $0x8] sm:$0xff] %vm161, %v183
  %vm186 = vcmask 261248
  %v187 = vsel %vm186, %v159, -inf
  %188 = vmax.xlane.f32.xlu0 %v187
  %v189 = vpop.xlane.xlu0 %188
  %v190 = vsel %vm186, %v160, -inf
  %191 = vmax.xlane.f32.xlu0 %v190
  %v192 = vpop.xlane.xlu0 %191
  %v193 = vsub.f32 %v159, %v189
  %v194 = vsub.f32 %v160, %v192
  %v195 = vmul.f32 %v193, 1.442695
  %v196 = vpow.pop %v195
  %v197 = vmul.f32 %v194, 1.442695
  %v198 = vpow.pop %v197
  %201 = vrot.lane.b32.xlu0 %v196, 112
  %v202 = vpop.permute.xlu0 %201
  %203 = vrot.lane.b32.xlu0 %v198, 112
  %v204 = vpop.permute.xlu0 %203
  %v207 = vsel %vm161, %v202, 0.0
  %208 = vadd.xlane.f32.xlu0 %v207
  %v209 = vpop.xlane.xlu0 %208
  %v210 = vsel %vm161, %v204, 0.0
  %211 = vadd.xlane.f32.xlu0 %v210
  %v212 = vpop.xlane.xlu0 %211
  %v213 = vrcp.pop %v209
  %v214 = vmul.f32 %v196, %v213
  %v215 = vrcp.pop %v212
  %v216 = vmul.f32 %v198, %v215
  %217 = vst.msk [vmem:[%s3] sm:$0xff] %vm186, %v214
  %218 = vst.msk [vmem:[%s3 + $0x8] sm:$0xff] %vm186, %v216
  // Predicated region
  $region14: #{separator_forward.17} parent=0 // pred_check
    _
  $region15: #{separator_forward.17} parent=0 // pred_check_branch
    %220 = sbr.rel (0) target = $region17
  $region16: #{separator_forward.17} parent=0 // pred_region
    _
  $region17: #{separator_forward.17} parent=0 // pred_fallthru
    _
  // Predicated region
  $region18: #{separator_forward.17} parent=0 // pred_check
    _
  $region19: #{separator_forward.17} parent=0 // pred_check_branch
    %222 = sbr.rel (0) target = $region21
  $region20: #{separator_forward.17} parent=0 // pred_region
    _
  $region21: #{separator_forward.17} parent=0 // pred_fallthru
    _

// kernel: separator_forward.10
$region0: #{separator_forward.10}
  #allocation0 [shape = 'u32[]', space=smem, size = 0x4, offset = 0x4, fixed_abs, tag = 'smem constant byte address 0x4 - core index']
  #allocation1 [shape = 'u32[144,128]{1,0:T(1,128)}', space=vmem, size = 0x12000, scoped, tag = 'internal scratch']
  %s0 = inlined_call_operand.vmem [shape: bf16[2,8,2,128], index: 0, kind: input, shape index: {}]
  %s1 = inlined_call_operand.vmem [shape: bf16[2,32,128], index: 1, kind: input, shape index: {}]
  %s2 = inlined_call_operand.vmem [shape: bf16[2,8,2,32], index: 2, kind: output, shape index: {}]
  %s3 = sld [smem:[#allocation0]]
  $region41: #{separator_forward.10} parent=0
    _
  %s5 = ssub.s32 1, %s3
  %s6 = scalar_select 0, %s5, %s3
  loop: start=0, step=1, limit=4
  $region2: #{separator_forward.10} parent=0 // loop_pre_header
    _
  $region3: #{separator_forward.10} parent=0 // loop_header
    %s8 = sphi 0, %s12
    %p9 = scmp.ge.s32.totalorder %s8, 4
    %s18 = sphi 0, %s20
    %s21 = sphi 0, %s18
    %s22 = sphi 0, %s21
    %s38 = sphi 0, %s22
    %s44 = sphi 0, %s46
    %s47 = sphi 0, %s44
    %s48 = sphi 0, %s47
    %s64 = sphi 0, %s48
    %s70 = sphi 0, %s72
    %s73 = sphi 0, %s70
    %s74 = sphi 0, %s73
    %s90 = sphi 0, %s74
  $region4: #{separator_forward.10} parent=0 // loop_header_branch
    %11 = sbr.rel (%p9) target = $region8
  $region5: #{separator_forward.10} parent=0 // loop_body
    %s13 = ssub.s32 %s8, 1
    %s14 = ssub.s32 %s8, 2
    %s15 = sadd.s32 %s8, 1
    %s16 = ssub.s32 %s8, %s15
    %p17 = scmp.eq.s32.totalorder %s16, 0
    %s19 = sadd.s32 %s18, 1
    %s20 = scalar_select %p17, %s18, %s19
    %p23 = pneg %p17
    %p24 = scmp.eq.s32.totalorder %s8, 1
    %p25 = por %p23, %p24
    %p26 = scmp.ne.s32.totalorder %s18, %s21
    %p27 = scmp.eq.s32.totalorder %s8, 0
    %p28 = por %p26, %p27
    %p29 = scmp.ne.s32.totalorder %s18, %s21
    %p30 = scmp.eq.s32.totalorder %s13, 1
    %p31 = por %p29, %p30
    %p32 = scmp.ne.s32.totalorder %s21, %s22
    %p33 = scmp.eq.s32.totalorder %s13, 0
    %p34 = por %p32, %p33
    %p35 = scmp.ne.s32.totalorder %s21, %s22
    %p36 = scmp.eq.s32.totalorder %s14, 1
    %p37 = por %p35, %p36
    %p39 = scmp.ne.s32.totalorder %s22, %s38
    %p40 = scmp.eq.s32.totalorder %s14, 0
    %p41 = por %p39, %p40
    %s42 = ssub.s32 %s8, %s15
    %p43 = scmp.eq.s32.totalorder %s42, 0
    %s45 = sadd.s32 %s44, 1
    %s46 = scalar_select %p43, %s44, %s45
    %p49 = pneg %p43
    %p50 = scmp.eq.s32.totalorder %s8, 1
    %p51 = por %p49, %p50
    %p52 = scmp.ne.s32.totalorder %s44, %s47
    %p53 = scmp.eq.s32.totalorder %s8, 0
    %p54 = por %p52, %p53
    %p55 = scmp.ne.s32.totalorder %s44, %s47
    %p56 = scmp.eq.s32.totalorder %s13, 1
    %p57 = por %p55, %p56
    %p58 = scmp.ne.s32.totalorder %s47, %s48
    %p59 = scmp.eq.s32.totalorder %s13, 0
    %p60 = por %p58, %p59
    %p61 = scmp.ne.s32.totalorder %s47, %s48
    %p62 = scmp.eq.s32.totalorder %s14, 1
    %p63 = por %p61, %p62
    %p65 = scmp.ne.s32.totalorder %s48, %s64
    %p66 = scmp.eq.s32.totalorder %s14, 0
    %p67 = por %p65, %p66
    %s68 = ssub.s32 %s8, %s15
    %p69 = scmp.eq.s32.totalorder %s68, 0
    %s71 = sadd.s32 %s70, 1
    %s72 = scalar_select %p69, %s70, %s71
    %p75 = pneg %p69
    %p76 = scmp.eq.s32.totalorder %s8, 1
    %p77 = por %p75, %p76
    %p78 = scmp.ne.s32.totalorder %s70, %s73
    %p79 = scmp.eq.s32.totalorder %s8, 0
    %p80 = por %p78, %p79
    %p81 = scmp.ne.s32.totalorder %s70, %s73
    %p82 = scmp.eq.s32.totalorder %s13, 1
    %p83 = por %p81, %p82
    %p84 = scmp.ne.s32.totalorder %s73, %s74
    %p85 = scmp.eq.s32.totalorder %s13, 0
    %p86 = por %p84, %p85
    %p87 = scmp.ne.s32.totalorder %s73, %s74
    %p88 = scmp.eq.s32.totalorder %s14, 1
    %p89 = por %p87, %p88
    %p91 = scmp.ne.s32.totalorder %s74, %s90
    %p92 = scmp.eq.s32.totalorder %s14, 0
    %p93 = por %p91, %p92
    %p94 = scmp.le.s32.totalorder 1, %s8
    %p95 = scmp.lt.s32.totalorder %s8, 3
    %p96 = pnand %p94, %p95
    %p97 = pneg %p96
    // Predicated region
    $region9: #{separator_forward.10} parent=5 // pred_check
      _
    $region10: #{separator_forward.10} parent=5 // pred_check_branch
      %99 = sbr.rel (%p96) target = $region12
    $region11: #{separator_forward.10} parent=5 // pred_region
      %s100 = ssub.s32 %s8, 1
    $region12: #{separator_forward.10} parent=5 // pred_fallthru
      _
    %p101 = scmp.lt.s32.totalorder %s8, 2
    // Predicated region
    $region13: #{separator_forward.10} parent=5 // pred_check
      %p102 = pneg %p101
    $region14: #{separator_forward.10} parent=5 // pred_check_branch
      %104 = sbr.rel (%p102) target = $region16
    $region15: #{separator_forward.10} parent=5 // pred_region
      // Predicated region
      $region17: #{separator_forward.10} parent=15 // pred_check
        %p105 = pneg %p28
      $region18: #{separator_forward.10} parent=15 // pred_check_branch
        %107 = sbr.rel (%p105) target = $region20
      $region19: #{separator_forward.10} parent=15 // pred_region
        %p108 = scmp.lt.s32.totalorder %s8, 1
        %s109 = scalar_select %p108, %s8, 1
        %s110 = smul.addr %s109, 8
        %s111 = scalar_lea.vmem %s0, %s110
      $region20: #{separator_forward.10} parent=15 // pred_fallthru
        _
      // Predicated region
      $region21: #{separator_forward.10} parent=15 // pred_check
        %p112 = pneg %p54
      $region22: #{separator_forward.10} parent=15 // pred_check_branch
        %114 = sbr.rel (%p112) target = $region24
      $region23: #{separator_forward.10} parent=15 // pred_region
        %p115 = scmp.lt.s32.totalorder %s8, 1
        %s116 = scalar_select %p115, %s8, 1
        %s117 = smul.addr %s116, 4
        %s118 = smul.addr %s117, 4
        %s119 = scalar_lea.vmem %s1, %s118
      $region24: #{separator_forward.10} parent=15 // pred_fallthru
        _
    $region16: #{separator_forward.10} parent=5 // pred_fallthru
      _
    %p120 = scmp.le.s32.totalorder 1, %s8
    %p121 = scmp.lt.s32.totalorder %s8, 3
    %p122 = pnand %p120, %p121
    %p123 = pneg %p122
    // Predicated region
    $region25: #{separator_forward.10} parent=5 // pred_check
      _
    $region26: #{separator_forward.10} parent=5 // pred_check_branch
      %125 = sbr.rel (%p122) target = $region28
    $region27: #{separator_forward.10} parent=5 // pred_region
      %s126 = ssub.s32 %s8, 1
      %p127 = scmp.lt.s32.totalorder %s13, 1
      %s128 = scalar_select %p127, %s13, 1
      %s129 = smul.addr %s128, 8
      %s130 = scalar_lea.vmem %s0, %s129
      %p131 = pneg %p34
      %p132 = pneg %p31
      %p133 = scmp.lt.s32.totalorder %s13, 1
      %s134 = scalar_select %p133, %s13, 1
      %s135 = smul.addr %s134, 4
      %s136 = smul.addr %s135, 4
      %s137 = scalar_lea.vmem %s1, %s136
      %p138 = pneg %p60
      %p139 = pneg %p57
      %p140 = pneg %p86
      %p141 = pneg %p83
      %p142 = scmp.lt.s32.totalorder %s13, 1
      %s143 = scalar_select %p142, %s13, 1
      %s144 = smul.addr %s143, 8
      %s145 = scalar_lea.vmem %s2, %s144
      %p146 = scmp.lt.s32.totalorder %s13, 1
      %s147 = scalar_select %p146, %s13, 1
      %s148 = smul.addr %s147, 8
      %s149 = scalar_lea.vmem %s0, %s148
      %p150 = scmp.lt.s32.totalorder %s13, 1
      %s151 = scalar_select %p150, %s13, 1
      %s152 = smul.addr %s151, 4
      %s153 = smul.addr %s152, 4
      %s154 = scalar_lea.vmem %s1, %s153
      %p155 = scmp.lt.s32.totalorder %s13, 1
      %s156 = scalar_select %p155, %s13, 1
      %s157 = smul.addr %s156, 8
      %s158 = scalar_lea.vmem %s2, %s157
      %p160 = scmp.eq.s32.totalorder %s13, 1
      %s161 = scalar_select %p160, 7, 0
      %s162 = scalar_lea.vmem %s149, %s161
      %v163 = vld [vmem:[%s162] sm:$0x1]
      %v164 = vunpack.c.l.bf16 %v163
      %v165 = vld [vmem:[%s154] sm:$0xf]
      %v166 = vld [vmem:[%s154 + $0x4] sm:$0xf]
      %v167 = vld [vmem:[%s154 + $0x8] sm:$0xf]
      %v168 = vld [vmem:[%s154 + $0xc] sm:$0xf]
      %v173 = vunpack.c.l.b16 %v165
      %v174 = vunpack.c.l.b16 %v166
      %v175 = vunpack.c.l.b16 %v167
      %v176 = vunpack.c.l.b16 %v168
      %v177 = vpack.c.b16 %v174, %v173
      %v178 = vpack.c.b16 %v176, %v175
      %vm181 = vcmask 261120
      %v183 = vsel %vm181, 0, 0
      %185 = vmatprep.subr.bf16.mxu0 0
      %186 = vmatpush1.bf16.msra.mxu0 0
      %187 = vmatprep.subr.bf16.mxu0 0
      %188 = vmatpush1.bf16.msra.mxu0 0
      %189 = vmatprep.subr.bf16.mxu0 0
      %190 = vmatpush1.bf16.msra.mxu0 0
      %191 = vmatprep.subr.bf16.mxu0 0
      %192 = vmatpush1.bf16.msra.mxu0 0
      %193 = vmatprep.subr.bf16.mxu0 0
      %194 = vmatpush1.bf16.msra.mxu0 0
      %195 = vmatprep.subr.bf16.mxu0 0
      %196 = vmatpush1.bf16.msra.mxu0 0
      %197 = vmatprep.subr.bf16.mxu0 0
      %198 = vmatpush1.bf16.msra.mxu0 %v178
      %199 = vmatprep.subr.bf16.mxu0 0
      %200 = vmatpush1.bf16.msra.mxu0 %v177
      %201 = vmatprep.subr.bf16.mxu0 0
      %202 = vmatpush2.bf16.msra.mxu0 0
      %203 = vmatprep.subr.bf16.mxu0 0
      %204 = vmatpush2.bf16.msra.mxu0 0
      %205 = vmatprep.subr.bf16.mxu0 0
      %206 = vmatpush2.bf16.msra.mxu0 0
      %207 = vmatprep.subr.bf16.mxu0 0
      %208 = vmatpush2.bf16.msra.mxu0 0
      %209 = vmatprep.subr.bf16.mxu0 0
      %210 = vmatpush2.bf16.msra.mxu0 0
      %211 = vmatprep.subr.bf16.mxu0 0
      %212 = vmatpush2.bf16.msra.mxu0 0
      %213 = vmatprep.subr.bf16.mxu0 0
      %214 = vmatpush2.bf16.msra.mxu0 0
      %215 = vmatprep.subr.bf16.mxu0 0
      %216 = vmatpush2.bf16.msra.mxu0 0
      %217 = vmatprep.mubr.bf16.mxu0 0
      %218 = vmatmul.mubr.bf16.gmra.mxu0 %v183
      %v219 = vpop.f32.mrf.mxu0
      %v220 = vadd.f32 0.0, %v219
      %v221 = vpop.f32.mrf.mxu0
      %v222 = vpop.f32.mrf.mxu0
      %v223 = vpop.f32.mrf.mxu0
      %224 = vdwg.mxu0
      %v225 = vadd.f32 %v164, %v220
      %v226 = vxor.u32 %v225, 2147483648
      %v227 = vmul.f32 %v226, 1.442695
      %v228 = vpow.pop %v227
      %v229 = vadd.f32 %v228, 1.0
      %v230 = vrcp.pop %v229
      %v231 = vmul.f32 1.0, %v230
      %v232 = vtanh.pop %v225
      %v233 = vmul.f32 %v231, 0.0
      %235 = vrot.lane.b32.xlu0 %v232, 64
      %v236 = vpop.permute.xlu0 %235
      %v238 = vmul.f32 %v231, %v236
      %240 = vrot.lane.b32.xlu0 %v238, 32
      %v241 = vpop.permute.xlu0 %240
      %v243 = vadd.f32 %v233, %v241
      %v244 = vtanh.pop %v243
      %246 = vrot.lane.b32.xlu0 %v244, 64
      %v247 = vpop.permute.xlu0 %246
      %v249 = vmul.f32 %v231, %v247
      %v250 = vpack.c.bf16 %v249, %v249
      %v253 = vunpack.c.l.s4 1966171168
      %v254 = vunpack.c.0.s8 %v253
      %v255 = vlaneseq
      %v256 = vshrl.u32 %v255, 7
      %v257 = vsub.s32 %v254, %v256
      %v258 = vrot.slane %v250, %v257
      %v260 = vunpack.c.l.s4 1966171168
      %v261 = vunpack.c.0.s8 %v260
      %v262 = vlaneseq
      %v263 = vshrl.u32 %v262, 7
      %v264 = vsub.s32 %v261, %v263
      %v265 = vrot.slane %v258, %v264
      %266 = vrot.lane.b32.xlu0 %v265, 32
      %v267 = vpop.permute.xlu0 %266
      %s269 = scalar_lea.vmem %s158, %s161
      %vm270 = vcmask 253952
      %271 = vst.msk [vmem:[%s269] sm:$0x1] %vm270, %v267
      %s272 = scalar_select %p160, 6, 1
      %s273 = scalar_lea.vmem %s149, %s272
      %v274 = vld [vmem:[%s273] sm:$0x1]
      %v275 = vunpack.c.l.bf16 %v274
      %v276 = vld [vmem:[%s154] sm:$0xf]
      %v277 = vld [vmem:[%s154 + $0x4] sm:$0xf]
      %v278 = vld [vmem:[%s154 + $0x8] sm:$0xf]
      %v279 = vld [vmem:[%s154 + $0xc] sm:$0xf]
      %280 = vrot.lane.b32.xlu0 %v250, 32
      %v281 = vpop.permute.xlu0 %280
      %v286 = vunpack.c.l.b16 %v276
      %v287 = vunpack.c.l.b16 %v277
      %v288 = vunpack.c.l.b16 %v278
      %v289 = vunpack.c.l.b16 %v279
      %v290 = vpack.c.b16 %v287, %v286
      %v291 = vpack.c.b16 %v289, %v288
      %v295 = vsel %vm181, %v281, 0
      %297 = vmatprep.subr.bf16.mxu0 0
      %298 = vmatpush1.bf16.msra.mxu0 0
      %299 = vmatprep.subr.bf16.mxu0 0
      %300 = vmatpush1.bf16.msra.mxu0 0
      %301 = vmatprep.subr.bf16.mxu0 0
      %302 = vmatpush1.bf16.msra.mxu0 0
      %303 = vmatprep.subr.bf16.mxu0 0
      %304 = vmatpush1.bf16.msra.mxu0 0
      %305 = vmatprep.subr.bf16.mxu0 0
      %306 = vmatpush1.bf16.msra.mxu0 0
      %307 = vmatprep.subr.bf16.mxu0 0
      %308 = vmatpush1.bf16.msra.mxu0 0
      %309 = vmatprep.subr.bf16.mxu0 0
      %310 = vmatpush1.bf16.msra.mxu0 %v291
      %311 = vmatprep.subr.bf16.mxu0 0
      %312 = vmatpush1.bf16.msra.mxu0 %v290
      %313 = vmatprep.subr.bf16.mxu0 0
      %314 = vmatpush2.bf16.msra.mxu0 0
      %315 = vmatprep.subr.bf16.mxu0 0
      %316 = vmatpush2.bf16.msra.mxu0 0
      %317 = vmatprep.subr.bf16.mxu0 0
      %318 = vmatpush2.bf16.msra.mxu0 0
      %319 = vmatprep.subr.bf16.mxu0 0
      %320 = vmatpush2.bf16.msra.mxu0 0
      %321 = vmatprep.subr.bf16.mxu0 0
      %322 = vmatpush2.bf16.msra.mxu0 0
      %323 = vmatprep.subr.bf16.mxu0 0
      %324 = vmatpush2.bf16.msra.mxu0 0
      %325 = vmatprep.subr.bf16.mxu0 0
      %326 = vmatpush2.bf16.msra.mxu0 0
      %327 = vmatprep.subr.bf16.mxu0 0
      %328 = vmatpush2.bf16.msra.mxu0 0
      %329 = vmatprep.mubr.bf16.mxu0 0
      %330 = vmatmul.mubr.bf16.gmra.mxu0 %v295
      %v331 = vpop.f32.mrf.mxu0
      %v332 = vadd.f32 0.0, %v331
      %v333 = vpop.f32.mrf.mxu0
      %v334 = vpop.f32.mrf.mxu0
      %v335 = vpop.f32.mrf.mxu0
      %336 = vdwg.mxu0
      %v337 = vadd.f32 %v275, %v332
      %v338 = vxor.u32 %v337, 2147483648
      %v339 = vmul.f32 %v338, 1.442695
      %v340 = vpow.pop %v339
      %v341 = vadd.f32 %v340, 1.0
      %v342 = vrcp.pop %v341
      %v343 = vmul.f32 1.0, %v342
      %v344 = vtanh.pop %v337
      %v345 = vmul.f32 %v343, %v243
      %347 = vrot.lane.b32.xlu0 %v344, 64
      %v348 = vpop.permute.xlu0 %347
      %v350 = vmul.f32 %v343, %v348
      %352 = vrot.lane.b32.xlu0 %v350, 32
      %v353 = vpop.permute.xlu0 %352
      %v355 = vadd.f32 %v345, %v353
      %v356 = vtanh.pop %v355
      %358 = vrot.lane.b32.xlu0 %v356, 64
      %v359 = vpop.permute.xlu0 %358
      %v361 = vmul.f32 %v343, %v359
      %v362 = vpack.c.bf16 %v361, %v361
      %v365 = vunpack.c.l.s4 1966171168
      %v366 = vunpack.c.0.s8 %v365
      %v367 = vlaneseq
      %v368 = vshrl.u32 %v367, 7
      %v369 = vsub.s32 %v366, %v368
      %v370 = vrot.slane %v362, %v369
      %v372 = vunpack.c.l.s4 1966171168
      %v373 = vunpack.c.0.s8 %v372
      %v374 = vlaneseq
      %v375 = vshrl.u32 %v374, 7
      %v376 = vsub.s32 %v373, %v375
      %v377 = vrot.slane %v370, %v376
      %378 = vrot.lane.b32.xlu0 %v377, 32
      %v379 = vpop.permute.xlu0 %378
      %s381 = scalar_lea.vmem %s158, %s272
      %382 = vst.msk [vmem:[%s381] sm:$0x1] %vm270, %v379
      %s383 = scalar_select %p160, 5, 2
      %s384 = scalar_lea.vmem %s149, %s383
      %v385 = vld [vmem:[%s384] sm:$0x1]
      %v386 = vunpack.c.l.bf16 %v385
      %v387 = vld [vmem:[%s154] sm:$0xf]
      %v388 = vld [vmem:[%s154 + $0x4] sm:$0xf]
      %v389 = vld [vmem:[%s154 + $0x8] sm:$0xf]
      %v390 = vld [vmem:[%s154 + $0xc] sm:$0xf]
      %391 = vrot.lane.b32.xlu0 %v362, 32
      %v392 = vpop.permute.xlu0 %391
      %v397 = vunpack.c.l.b16 %v387
      %v398 = vunpack.c.l.b16 %v388
      %v399 = vunpack.c.l.b16 %v389
      %v400 = vunpack.c.l.b16 %v390
      %v401 = vpack.c.b16 %v398, %v397
      %v402 = vpack.c.b16 %v400, %v399
      %v406 = vsel %vm181, %v392, 0
      %408 = vmatprep.subr.bf16.mxu0 0
      %409 = vmatpush1.bf16.msra.mxu0 0
      %410 = vmatprep.subr.bf16.mxu0 0
      %411 = vmatpush1.bf16.msra.mxu0 0
      %412 = vmatprep.subr.bf16.mxu0 0
      %413 = vmatpush1.bf16.msra.mxu0 0
      %414 = vmatprep.subr.bf16.mxu0 0
      %415 = vmatpush1.bf16.msra.mxu0 0
      %416 = vmatprep.subr.bf16.mxu0 0
      %417 = vmatpush1.bf16.msra.mxu0 0
      %418 = vmatprep.subr.bf16.mxu0 0
      %419 = vmatpush1.bf16.msra.mxu0 0
      %420 = vmatprep.subr.bf16.mxu0 0
      %421 = vmatpush1.bf16.msra.mxu0 %v402
      %422 = vmatprep.subr.bf16.mxu0 0
      %423 = vmatpush1.bf16.msra.mxu0 %v401
      %424 = vmatprep.subr.bf16.mxu0 0
      %425 = vmatpush2.bf16.msra.mxu0 0
      %426 = vmatprep.subr.bf16.mxu0 0
      %427 = vmatpush2.bf16.msra.mxu0 0
      %428 = vmatprep.subr.bf16.mxu0 0
      %429 = vmatpush2.bf16.msra.mxu0 0
      %430 = vmatprep.subr.bf16.mxu0 0
      %431 = vmatpush2.bf16.msra.mxu0 0
      %432 = vmatprep.subr.bf16.mxu0 0
      %433 = vmatpush2.bf16.msra.mxu0 0
      %434 = vmatprep.subr.bf16.mxu0 0
      %435 = vmatpush2.bf16.msra.mxu0 0
      %436 = vmatprep.subr.bf16.mxu0 0
      %437 = vmatpush2.bf16.msra.mxu0 0
      %438 = vmatprep.subr.bf16.mxu0 0
      %439 = vmatpush2.bf16.msra.mxu0 0
      %440 = vmatprep.mubr.bf16.mxu0 0
      %441 = vmatmul.mubr.bf16.gmra.mxu0 %v406
      %v442 = vpop.f32.mrf.mxu0
      %v443 = vadd.f32 0.0, %v442
      %v444 = vpop.f32.mrf.mxu0
      %v445 = vpop.f32.mrf.mxu0
      %v446 = vpop.f32.mrf.mxu0
      %447 = vdwg.mxu0
      %v448 = vadd.f32 %v386, %v443
      %v449 = vxor.u32 %v448, 2147483648
      %v450 = vmul.f32 %v449, 1.442695
      %v451 = vpow.pop %v450
      %v452 = vadd.f32 %v451, 1.0
      %v453 = vrcp.pop %v452
      %v454 = vmul.f32 1.0, %v453
      %v455 = vtanh.pop %v448
      %v456 = vmul.f32 %v454, %v355
      %458 = vrot.lane.b32.xlu0 %v455, 64
      %v459 = vpop.permute.xlu0 %458
      %v461 = vmul.f32 %v454, %v459
      %463 = vrot.lane.b32.xlu0 %v461, 32
      %v464 = vpop.permute.xlu0 %463
      %v466 = vadd.f32 %v456, %v464
      %v467 = vtanh.pop %v466
      %469 = vrot.lane.b32.xlu0 %v467, 64
      %v470 = vpop.permute.xlu0 %469
      %v472 = vmul.f32 %v454, %v470
      %v473 = vpack.c.bf16 %v472, %v472
      %v476 = vunpack.c.l.s4 1966171168
      %v477 = vunpack.c.0.s8 %v476
      %v478 = vlaneseq
      %v479 = vshrl.u32 %v478, 7
      %v480 = vsub.s32 %v477, %v479
      %v481 = vrot.slane %v473, %v480
      %v483 = vunpack.c.l.s4 1966171168
      %v484 = vunpack.c.0.s8 %v483
      %v485 = vlaneseq
      %v486 = vshrl.u32 %v485, 7
      %v487 = vsub.s32 %v484, %v486
      %v488 = vrot.slane %v481, %v487
      %489 = vrot.lane.b32.xlu0 %v488, 32
      %v490 = vpop.permute.xlu0 %489
      %s492 = scalar_lea.vmem %s158, %s383
      %493 = vst.msk [vmem:[%s492] sm:$0x1] %vm270, %v490
      %s494 = scalar_select %p160, 4, 3
      %s495 = scalar_lea.vmem %s149, %s494
      %v496 = vld [vmem:[%s495] sm:$0x1]
      %v497 = vunpack.c.l.bf16 %v496
      %v498 = vld [vmem:[%s154] sm:$0xf]
      %v499 = vld [vmem:[%s154 + $0x4] sm:$0xf]
      %v500 = vld [vmem:[%s154 + $0x8] sm:$0xf]
      %v501 = vld [vmem:[%s154 + $0xc] sm:$0xf]
      %502 = vrot.lane.b32.xlu0 %v473, 32
      %v503 = vpop.permute.xlu0 %502
      %v508 = vunpack.c.l.b16 %v498
      %v509 = vunpack.c.l.b16 %v499
      %v510 = vunpack.c.l.b16 %v500
      %v511 = vunpack.c.l.b16 %v501
      %v512 = vpack.c.b16 %v509, %v508
      %v513 = vpack.c.b16 %v511, %v510
      %v517 = vsel %vm181, %v503, 0
      %519 = vmatprep.subr.bf16.mxu0 0
      %520 = vmatpush1.bf16.msra.mxu0 0
      %521 = vmatprep.subr.bf16.mxu0 0
      %522 = vmatpush1.bf16.msra.mxu0 0
      %523 = vmatprep.subr.bf16.mxu0 0
      %524 = vmatpush1.bf16.msra.mxu0 0
      %525 = vmatprep.subr.bf16.mxu0 0
      %526 = vmatpush1.bf16.msra.mxu0 0
      %527 = vmatprep.subr.bf16.mxu0 0
      %528 = vmatpush1.bf16.msra.mxu0 0
      %529 = vmatprep.subr.bf16.mxu0 0
      %530 = vmatpush1.bf16.msra.mxu0 0
      %531 = vmatprep.subr.bf16.mxu0 0
      %532 = vmatpush1.bf16.msra.mxu0 %v513
      %533 = vmatprep.subr.bf16.mxu0 0
      %534 = vmatpush1.bf16.msra.mxu0 %v512
      %535 = vmatprep.subr.bf16.mxu0 0
      %536 = vmatpush2.bf16.msra.mxu0 0
      %537 = vmatprep.subr.bf16.mxu0 0
      %538 = vmatpush2.bf16.msra.mxu0 0
      %539 = vmatprep.subr.bf16.mxu0 0
      %540 = vmatpush2.bf16.msra.mxu0 0
      %541 = vmatprep.subr.bf16.mxu0 0
      %542 = vmatpush2.bf16.msra.mxu0 0
      %543 = vmatprep.subr.bf16.mxu0 0
      %544 = vmatpush2.bf16.msra.mxu0 0
      %545 = vmatprep.subr.bf16.mxu0 0
      %546 = vmatpush2.bf16.msra.mxu0 0
      %547 = vmatprep.subr.bf16.mxu0 0
      %548 = vmatpush2.bf16.msra.mxu0 0
      %549 = vmatprep.subr.bf16.mxu0 0
      %550 = vmatpush2.bf16.msra.mxu0 0
      %551 = vmatprep.mubr.bf16.mxu0 0
      %552 = vmatmul.mubr.bf16.gmra.mxu0 %v517
      %v553 = vpop.f32.mrf.mxu0
      %v554 = vadd.f32 0.0, %v553
      %v555 = vpop.f32.mrf.mxu0
      %v556 = vpop.f32.mrf.mxu0
      %v557 = vpop.f32.mrf.mxu0
      %558 = vdwg.mxu0
      %v559 = vadd.f32 %v497, %v554
      %v560 = vxor.u32 %v559, 2147483648
      %v561 = vmul.f32 %v560, 1.442695
      %v562 = vpow.pop %v561
      %v563 = vadd.f32 %v562, 1.0
      %v564 = vrcp.pop %v563
      %v565 = vmul.f32 1.0, %v564
      %v566 = vtanh.pop %v559
      %v567 = vmul.f32 %v565, %v466
      %569 = vrot.lane.b32.xlu0 %v566, 64
      %v570 = vpop.permute.xlu0 %569
      %v572 = vmul.f32 %v565, %v570
      %574 = vrot.lane.b32.xlu0 %v572, 32
      %v575 = vpop.permute.xlu0 %574
      %v577 = vadd.f32 %v567, %v575
      %v578 = vtanh.pop %v577
      %580 = vrot.lane.b32.xlu0 %v578, 64
      %v581 = vpop.permute.xlu0 %580
      %v583 = vmul.f32 %v565, %v581
      %v584 = vpack.c.bf16 %v583, %v583
      %v587 = vunpack.c.l.s4 1966171168
      %v588 = vunpack.c.0.s8 %v587
      %v589 = vlaneseq
      %v590 = vshrl.u32 %v589, 7
      %v591 = vsub.s32 %v588, %v590
      %v592 = vrot.slane %v584, %v591
      %v594 = vunpack.c.l.s4 1966171168
      %v595 = vunpack.c.0.s8 %v594
      %v596 = vlaneseq
      %v597 = vshrl.u32 %v596, 7
      %v598 = vsub.s32 %v595, %v597
      %v599 = vrot.slane %v592, %v598
      %600 = vrot.lane.b32.xlu0 %v599, 32
      %v601 = vpop.permute.xlu0 %600
      %s603 = scalar_lea.vmem %s158, %s494
      %604 = vst.msk [vmem:[%s603] sm:$0x1] %vm270, %v601
      %s605 = scalar_select %p160, 3, 4
      %s606 = scalar_lea.vmem %s149, %s605
      %v607 = vld [vmem:[%s606] sm:$0x1]
      %v608 = vunpack.c.l.bf16 %v607
      %v609 = vld [vmem:[%s154] sm:$0xf]
      %v610 = vld [vmem:[%s154 + $0x4] sm:$0xf]
      %v611 = vld [vmem:[%s154 + $0x8] sm:$0xf]
      %v612 = vld [vmem:[%s154 + $0xc] sm:$0xf]
      %613 = vrot.lane.b32.xlu0 %v584, 32
      %v614 = vpop.permute.xlu0 %613
      %v619 = vunpack.c.l.b16 %v609
      %v620 = vunpack.c.l.b16 %v610
      %v621 = vunpack.c.l.b16 %v611
      %v622 = vunpack.c.l.b16 %v612
      %v623 = vpack.c.b16 %v620, %v619
      %v624 = vpack.c.b16 %v622, %v621
      %v628 = vsel %vm181, %v614, 0
      %630 = vmatprep.subr.bf16.mxu0 0
      %631 = vmatpush1.bf16.msra.mxu0 0
      %632 = vmatprep.subr.bf16.mxu0 0
      %633 = vmatpush1.bf16.msra.mxu0 0
      %634 = vmatprep.subr.bf16.mxu0 0
      %635 = vmatpush1.bf16.msra.mxu0 0
      %636 = vmatprep.subr.bf16.mxu0 0
      %637 = vmatpush1.bf16.msra.mxu0 0
      %638 = vmatprep.subr.bf16.mxu0 0
      %639 = vmatpush1.bf16.msra.mxu0 0
      %640 = vmatprep.subr.bf16.mxu0 0
      %641 = vmatpush1.bf16.msra.mxu0 0
      %642 = vmatprep.subr.bf16.mxu0 0
      %643 = vmatpush1.bf16.msra.mxu0 %v624
      %644 = vmatprep.subr.bf16.mxu0 0
      %645 = vmatpush1.bf16.msra.mxu0 %v623
      %646 = vmatprep.subr.bf16.mxu0 0
      %647 = vmatpush2.bf16.msra.mxu0 0
      %648 = vmatprep.subr.bf16.mxu0 0
      %649 = vmatpush2.bf16.msra.mxu0 0
      %650 = vmatprep.subr.bf16.mxu0 0
      %651 = vmatpush2.bf16.msra.mxu0 0
      %652 = vmatprep.subr.bf16.mxu0 0
      %653 = vmatpush2.bf16.msra.mxu0 0
      %654 = vmatprep.subr.bf16.mxu0 0
      %655 = vmatpush2.bf16.msra.mxu0 0
      %656 = vmatprep.subr.bf16.mxu0 0
      %657 = vmatpush2.bf16.msra.mxu0 0
      %658 = vmatprep.subr.bf16.mxu0 0
      %659 = vmatpush2.bf16.msra.mxu0 0
      %660 = vmatprep.subr.bf16.mxu0 0
      %661 = vmatpush2.bf16.msra.mxu0 0
      %662 = vmatprep.mubr.bf16.mxu0 0
      %663 = vmatmul.mubr.bf16.gmra.mxu0 %v628
      %v664 = vpop.f32.mrf.mxu0
      %v665 = vadd.f32 0.0, %v664
      %v666 = vpop.f32.mrf.mxu0
      %v667 = vpop.f32.mrf.mxu0
      %v668 = vpop.f32.mrf.mxu0
      %669 = vdwg.mxu0
      %v670 = vadd.f32 %v608, %v665
      %v671 = vxor.u32 %v670, 2147483648
      %v672 = vmul.f32 %v671, 1.442695
      %v673 = vpow.pop %v672
      %v674 = vadd.f32 %v673, 1.0
      %v675 = vrcp.pop %v674
      %v676 = vmul.f32 1.0, %v675
      %v677 = vtanh.pop %v670
      %v678 = vmul.f32 %v676, %v577
      %680 = vrot.lane.b32.xlu0 %v677, 64
      %v681 = vpop.permute.xlu0 %680
      %v683 = vmul.f32 %v676, %v681
      %685 = vrot.lane.b32.xlu0 %v683, 32
      %v686 = vpop.permute.xlu0 %685
      %v688 = vadd.f32 %v678, %v686
      %v689 = vtanh.pop %v688
      %691 = vrot.lane.b32.xlu0 %v689, 64
      %v692 = vpop.permute.xlu0 %691
      %v694 = vmul.f32 %v676, %v692
      %v695 = vpack.c.bf16 %v694, %v694
      %v698 = vunpack.c.l.s4 1966171168
      %v699 = vunpack.c.0.s8 %v698
      %v700 = vlaneseq
      %v701 = vshrl.u32 %v700, 7
      %v702 = vsub.s32 %v699, %v701
      %v703 = vrot.slane %v695, %v702
      %v705 = vunpack.c.l.s4 1966171168
      %v706 = vunpack.c.0.s8 %v705
      %v707 = vlaneseq
      %v708 = vshrl.u32 %v707, 7
      %v709 = vsub.s32 %v706, %v708
      %v710 = vrot.slane %v703, %v709
      %711 = vrot.lane.b32.xlu0 %v710, 32
      %v712 = vpop.permute.xlu0 %711
      %s714 = scalar_lea.vmem %s158, %s605
      %715 = vst.msk [vmem:[%s714] sm:$0x1] %vm270, %v712
      %s716 = scalar_select %p160, 2, 5
      %s717 = scalar_lea.vmem %s149, %s716
      %v718 = vld [vmem:[%s717] sm:$0x1]
      %v719 = vunpack.c.l.bf16 %v718
      %v720 = vld [vmem:[%s154] sm:$0xf]
      %v721 = vld [vmem:[%s154 + $0x4] sm:$0xf]
      %v722 = vld [vmem:[%s154 + $0x8] sm:$0xf]
      %v723 = vld [vmem:[%s154 + $0xc] sm:$0xf]
      %724 = vrot.lane.b32.xlu0 %v695, 32
      %v725 = vpop.permute.xlu0 %724
      %v730 = vunpack.c.l.b16 %v720
      %v731 = vunpack.c.l.b16 %v721
      %v732 = vunpack.c.l.b16 %v722
      %v733 = vunpack.c.l.b16 %v723
      %v734 = vpack.c.b16 %v731, %v730
      %v735 = vpack.c.b16 %v733, %v732
      %v739 = vsel %vm181, %v725, 0
      %741 = vmatprep.subr.bf16.mxu0 0
      %742 = vmatpush1.bf16.msra.mxu0 0
      %743 = vmatprep.subr.bf16.mxu0 0
      %744 = vmatpush1.bf16.msra.mxu0 0
      %745 = vmatprep.subr.bf16.mxu0 0
      %746 = vmatpush1.bf16.msra.mxu0 0
      %747 = vmatprep.subr.bf16.mxu0 0
      %748 = vmatpush1.bf16.msra.mxu0 0
      %749 = vmatprep.subr.bf16.mxu0 0
      %750 = vmatpush1.bf16.msra.mxu0 0
      %751 = vmatprep.subr.bf16.mxu0 0
      %752 = vmatpush1.bf16.msra.mxu0 0
      %753 = vmatprep.subr.bf16.mxu0 0
      %754 = vmatpush1.bf16.msra.mxu0 %v735
      %755 = vmatprep.subr.bf16.mxu0 0
      %756 = vmatpush1.bf16.msra.mxu0 %v734
      %757 = vmatprep.subr.bf16.mxu0 0
      %758 = vmatpush2.bf16.msra.mxu0 0
      %759 = vmatprep.subr.bf16.mxu0 0
      %760 = vmatpush2.bf16.msra.mxu0 0
      %761 = vmatprep.subr.bf16.mxu0 0
      %762 = vmatpush2.bf16.msra.mxu0 0
      %763 = vmatprep.subr.bf16.mxu0 0
      %764 = vmatpush2.bf16.msra.mxu0 0
      %765 = vmatprep.subr.bf16.mxu0 0
      %766 = vmatpush2.bf16.msra.mxu0 0
      %767 = vmatprep.subr.bf16.mxu0 0
      %768 = vmatpush2.bf16.msra.mxu0 0
      %769 = vmatprep.subr.bf16.mxu0 0
      %770 = vmatpush2.bf16.msra.mxu0 0
      %771 = vmatprep.subr.bf16.mxu0 0
      %772 = vmatpush2.bf16.msra.mxu0 0
      %773 = vmatprep.mubr.bf16.mxu0 0
      %774 = vmatmul.mubr.bf16.gmra.mxu0 %v739
      %v775 = vpop.f32.mrf.mxu0
      %v776 = vadd.f32 0.0, %v775
      %v777 = vpop.f32.mrf.mxu0
      %v778 = vpop.f32.mrf.mxu0
      %v779 = vpop.f32.mrf.mxu0
      %780 = vdwg.mxu0
      %v781 = vadd.f32 %v719, %v776
      %v782 = vxor.u32 %v781, 2147483648
      %v783 = vmul.f32 %v782, 1.442695
      %v784 = vpow.pop %v783
      %v785 = vadd.f32 %v784, 1.0
      %v786 = vrcp.pop %v785
      %v787 = vmul.f32 1.0, %v786
      %v788 = vtanh.pop %v781
      %v789 = vmul.f32 %v787, %v688
      %791 = vrot.lane.b32.xlu0 %v788, 64
      %v792 = vpop.permute.xlu0 %791
      %v794 = vmul.f32 %v787, %v792
      %796 = vrot.lane.b32.xlu0 %v794, 32
      %v797 = vpop.permute.xlu0 %796
      %v799 = vadd.f32 %v789, %v797
      %v800 = vtanh.pop %v799
      %802 = vrot.lane.b32.xlu0 %v800, 64
      %v803 = vpop.permute.xlu0 %802
      %v805 = vmul.f32 %v787, %v803
      %v806 = vpack.c.bf16 %v805, %v805
      %v809 = vunpack.c.l.s4 1966171168
      %v810 = vunpack.c.0.s8 %v809
      %v811 = vlaneseq
      %v812 = vshrl.u32 %v811, 7
      %v813 = vsub.s32 %v810, %v812
      %v814 = vrot.slane %v806, %v813
      %v816 = vunpack.c.l.s4 1966171168
      %v817 = vunpack.c.0.s8 %v816
      %v818 = vlaneseq
      %v819 = vshrl.u32 %v818, 7
      %v820 = vsub.s32 %v817, %v819
      %v821 = vrot.slane %v814, %v820
      %822 = vrot.lane.b32.xlu0 %v821, 32
      %v823 = vpop.permute.xlu0 %822
      %s825 = scalar_lea.vmem %s158, %s716
      %826 = vst.msk [vmem:[%s825] sm:$0x1] %vm270, %v823
      %s827 = scalar_select %p160, 1, 6
      %s828 = scalar_lea.vmem %s149, %s827
      %v829 = vld [vmem:[%s828] sm:$0x1]
      %v830 = vunpack.c.l.bf16 %v829
      %v831 = vld [vmem:[%s154] sm:$0xf]
      %v832 = vld [vmem:[%s154 + $0x4] sm:$0xf]
      %v833 = vld [vmem:[%s154 + $0x8] sm:$0xf]
      %v834 = vld [vmem:[%s154 + $0xc] sm:$0xf]
      %835 = vrot.lane.b32.xlu0 %v806, 32
      %v836 = vpop.permute.xlu0 %835
      %v841 = vunpack.c.l.b16 %v831
      %v842 = vunpack.c.l.b16 %v832
      %v843 = vunpack.c.l.b16 %v833
      %v844 = vunpack.c.l.b16 %v834
      %v845 = vpack.c.b16 %v842, %v841
      %v846 = vpack.c.b16 %v844, %v843
      %v850 = vsel %vm181, %v836, 0
      %852 = vmatprep.subr.bf16.mxu0 0
      %853 = vmatpush1.bf16.msra.mxu0 0
      %854 = vmatprep.subr.bf16.mxu0 0
      %855 = vmatpush1.bf16.msra.mxu0 0
      %856 = vmatprep.subr.bf16.mxu0 0
      %857 = vmatpush1.bf16.msra.mxu0 0
      %858 = vmatprep.subr.bf16.mxu0 0
      %859 = vmatpush1.bf16.msra.mxu0 0
      %860 = vmatprep.subr.bf16.mxu0 0
      %861 = vmatpush1.bf16.msra.mxu0 0
      %862 = vmatprep.subr.bf16.mxu0 0
      %863 = vmatpush1.bf16.msra.mxu0 0
      %864 = vmatprep.subr.bf16.mxu0 0
      %865 = vmatpush1.bf16.msra.mxu0 %v846
      %866 = vmatprep.subr.bf16.mxu0 0
      %867 = vmatpush1.bf16.msra.mxu0 %v845
      %868 = vmatprep.subr.bf16.mxu0 0
      %869 = vmatpush2.bf16.msra.mxu0 0
      %870 = vmatprep.subr.bf16.mxu0 0
      %871 = vmatpush2.bf16.msra.mxu0 0
      %872 = vmatprep.subr.bf16.mxu0 0
      %873 = vmatpush2.bf16.msra.mxu0 0
      %874 = vmatprep.subr.bf16.mxu0 0
      %875 = vmatpush2.bf16.msra.mxu0 0
      %876 = vmatprep.subr.bf16.mxu0 0
      %877 = vmatpush2.bf16.msra.mxu0 0
      %878 = vmatprep.subr.bf16.mxu0 0
      %879 = vmatpush2.bf16.msra.mxu0 0
      %880 = vmatprep.subr.bf16.mxu0 0
      %881 = vmatpush2.bf16.msra.mxu0 0
      %882 = vmatprep.subr.bf16.mxu0 0
      %883 = vmatpush2.bf16.msra.mxu0 0
      %884 = vmatprep.mubr.bf16.mxu0 0
      %885 = vmatmul.mubr.bf16.gmra.mxu0 %v850
      %v886 = vpop.f32.mrf.mxu0
      %v887 = vadd.f32 0.0, %v886
      %v888 = vpop.f32.mrf.mxu0
      %v889 = vpop.f32.mrf.mxu0
      %v890 = vpop.f32.mrf.mxu0
      %891 = vdwg.mxu0
      %v892 = vadd.f32 %v830, %v887
      %v893 = vxor.u32 %v892, 2147483648
      %v894 = vmul.f32 %v893, 1.442695
      %v895 = vpow.pop %v894
      %v896 = vadd.f32 %v895, 1.0
      %v897 = vrcp.pop %v896
      %v898 = vmul.f32 1.0, %v897
      %v899 = vtanh.pop %v892
      %v900 = vmul.f32 %v898, %v799
      %902 = vrot.lane.b32.xlu0 %v899, 64
      %v903 = vpop.permute.xlu0 %902
      %v905 = vmul.f32 %v898, %v903
      %907 = vrot.lane.b32.xlu0 %v905, 32
      %v908 = vpop.permute.xlu0 %907
      %v910 = vadd.f32 %v900, %v908
      %v911 = vtanh.pop %v910
      %913 = vrot.lane.b32.xlu0 %v911, 64
      %v914 = vpop.permute.xlu0 %913
      %v916 = vmul.f32 %v898, %v914
      %v917 = vpack.c.bf16 %v916, %v916
      %v920 = vunpack.c.l.s4 1966171168
      %v921 = vunpack.c.0.s8 %v920
      %v922 = vlaneseq
      %v923 = vshrl.u32 %v922, 7
      %v924 = vsub.s32 %v921, %v923
      %v925 = vrot.slane %v917, %v924
      %v927 = vunpack.c.l.s4 1966171168
      %v928 = vunpack.c.0.s8 %v927
      %v929 = vlaneseq
      %v930 = vshrl.u32 %v929, 7
      %v931 = vsub.s32 %v928, %v930
      %v932 = vrot.slane %v925, %v931
      %933 = vrot.lane.b32.xlu0 %v932, 32
      %v934 = vpop.permute.xlu0 %933
      %s936 = scalar_lea.vmem %s158, %s827
      %937 = vst.msk [vmem:[%s936] sm:$0x1] %vm270, %v934
      %s938 = scalar_select %p160, 0, 7
      %s939 = scalar_lea.vmem %s149, %s938
      %v940 = vld [vmem:[%s939] sm:$0x1]
      %v941 = vunpack.c.l.bf16 %v940
      %v942 = vld [vmem:[%s154] sm:$0xf]
      %v943 = vld [vmem:[%s154 + $0x4] sm:$0xf]
      %v944 = vld [vmem:[%s154 + $0x8] sm:$0xf]
      %v945 = vld [vmem:[%s154 + $0xc] sm:$0xf]
      %946 = vrot.lane.b32.xlu0 %v917, 32
      %v947 = vpop.permute.xlu0 %946
      %v952 = vunpack.c.l.b16 %v942
      %v953 = vunpack.c.l.b16 %v943
      %v954 = vunpack.c.l.b16 %v944
      %v955 = vunpack.c.l.b16 %v945
      %v956 = vpack.c.b16 %v953, %v952
      %v957 = vpack.c.b16 %v955, %v954
      %v961 = vsel %vm181, %v947, 0
      %963 = vmatprep.subr.bf16.mxu0 0
      %964 = vmatpush1.bf16.msra.mxu0 0
      %965 = vmatprep.subr.bf16.mxu0 0
      %966 = vmatpush1.bf16.msra.mxu0 0
      %967 = vmatprep.subr.bf16.mxu0 0
      %968 = vmatpush1.bf16.msra.mxu0 0
      %969 = vmatprep.subr.bf16.mxu0 0
      %970 = vmatpush1.bf16.msra.mxu0 0
      %971 = vmatprep.subr.bf16.mxu0 0
      %972 = vmatpush1.bf16.msra.mxu0 0
      %973 = vmatprep.subr.bf16.mxu0 0
      %974 = vmatpush1.bf16.msra.mxu0 0
      %975 = vmatprep.subr.bf16.mxu0 0
      %976 = vmatpush1.bf16.msra.mxu0 %v957
      %977 = vmatprep.subr.bf16.mxu0 0
      %978 = vmatpush1.bf16.msra.mxu0 %v956
      %979 = vmatprep.subr.bf16.mxu0 0
      %980 = vmatpush2.bf16.msra.mxu0 0
      %981 = vmatprep.subr.bf16.mxu0 0
      %982 = vmatpush2.bf16.msra.mxu0 0
      %983 = vmatprep.subr.bf16.mxu0 0
      %984 = vmatpush2.bf16.msra.mxu0 0
      %985 = vmatprep.subr.bf16.mxu0 0
      %986 = vmatpush2.bf16.msra.mxu0 0
      %987 = vmatprep.subr.bf16.mxu0 0
      %988 = vmatpush2.bf16.msra.mxu0 0
      %989 = vmatprep.subr.bf16.mxu0 0
      %990 = vmatpush2.bf16.msra.mxu0 0
      %991 = vmatprep.subr.bf16.mxu0 0
      %992 = vmatpush2.bf16.msra.mxu0 0
      %993 = vmatprep.subr.bf16.mxu0 0
      %994 = vmatpush2.bf16.msra.mxu0 0
      %995 = vmatprep.mubr.bf16.mxu0 0
      %996 = vmatmul.mubr.bf16.gmra.mxu0 %v961
      %v997 = vpop.f32.mrf.mxu0
      %v998 = vadd.f32 0.0, %v997
      %v999 = vpop.f32.mrf.mxu0
      %v1000 = vpop.f32.mrf.mxu0
      %v1001 = vpop.f32.mrf.mxu0
      %1002 = vdwg.mxu0
      %v1003 = vadd.f32 %v941, %v998
      %v1004 = vxor.u32 %v1003, 2147483648
      %v1005 = vmul.f32 %v1004, 1.442695
      %v1006 = vpow.pop %v1005
      %v1007 = vadd.f32 %v1006, 1.0
      %v1008 = vrcp.pop %v1007
      %v1009 = vmul.f32 1.0, %v1008
      %v1010 = vtanh.pop %v1003
      %v1011 = vmul.f32 %v1009, %v910
      %1013 = vrot.lane.b32.xlu0 %v1010, 64
      %v1014 = vpop.permute.xlu0 %1013
      %v1016 = vmul.f32 %v1009, %v1014
      %1018 = vrot.lane.b32.xlu0 %v1016, 32
      %v1019 = vpop.permute.xlu0 %1018
      %v1021 = vadd.f32 %v1011, %v1019
      %v1022 = vtanh.pop %v1021
      %1024 = vrot.lane.b32.xlu0 %v1022, 64
      %v1025 = vpop.permute.xlu0 %1024
      %v1027 = vmul.f32 %v1009, %v1025
      %v1028 = vpack.c.bf16 %v1027, %v1027
      %v1031 = vunpack.c.l.s4 1966171168
      %v1032 = vunpack.c.0.s8 %v1031
      %v1033 = vlaneseq
      %v1034 = vshrl.u32 %v1033, 7
      %v1035 = vsub.s32 %v1032, %v1034
      %v1036 = vrot.slane %v1028, %v1035
      %v1038 = vunpack.c.l.s4 1966171168
      %v1039 = vunpack.c.0.s8 %v1038
      %v1040 = vlaneseq
      %v1041 = vshrl.u32 %v1040, 7
      %v1042 = vsub.s32 %v1039, %v1041
      %v1043 = vrot.slane %v1036, %v1042
      %1044 = vrot.lane.b32.xlu0 %v1043, 32
      %v1045 = vpop.permute.xlu0 %1044
      %s1047 = scalar_lea.vmem %s158, %s938
      %1048 = vst.msk [vmem:[%s1047] sm:$0x1] %vm270, %v1045
      %p1049 = scmp.lt.s32.totalorder %s13, 1
      %s1050 = scalar_select %p1049, %s13, 1
      %s1051 = smul.addr %s1050, 8
      %s1052 = scalar_lea.vmem %s2, %s1051
      // Predicated region
      $region29: #{separator_forward.10} parent=27 // pred_check
        %p1053 = pneg %p83
      $region30: #{separator_forward.10} parent=27 // pred_check_branch
        %1055 = sbr.rel (%p1053) target = $region32
      $region31: #{separator_forward.10} parent=27 // pred_region
        _
      $region32: #{separator_forward.10} parent=27 // pred_fallthru
        _
    $region28: #{separator_forward.10} parent=5 // pred_fallthru
      _
    %p1056 = scmp.le.s32.totalorder 2, %s8
    // Predicated region
    $region33: #{separator_forward.10} parent=5 // pred_check
      %p1057 = pneg %p1056
    $region34: #{separator_forward.10} parent=5 // pred_check_branch
      %1059 = sbr.rel (%p1057) target = $region36
    $region35: #{separator_forward.10} parent=5 // pred_region
      %s1060 = ssub.s32 %s8, 2
      // Predicated region
      $region37: #{separator_forward.10} parent=35 // pred_check
        %p1061 = pneg %p89
      $region38: #{separator_forward.10} parent=35 // pred_check_branch
        %1063 = sbr.rel (%p1061) target = $region40
      $region39: #{separator_forward.10} parent=35 // pred_region
        %p1064 = scmp.lt.s32.totalorder %s14, 1
        %s1065 = scalar_select %p1064, %s14, 1
        %s1066 = smul.addr %s1065, 8
        %s1067 = scalar_lea.vmem %s2, %s1066
      $region40: #{separator_forward.10} parent=35 // pred_fallthru
        _
    $region36: #{separator_forward.10} parent=5 // pred_fallthru
      _
  $region6: #{separator_forward.10} parent=0 // loop_footer
    %s12 = sadd.s32 1, %s8
  $region7: #{separator_forward.10} parent=0 // loop_footer_branch
    %7 = sbr.rel target = $region3
  $region8: #{separator_forward.10} parent=0 // loop_exit
    _

</llo_original>
